<compile_context>
chip_gen: v7x
topology: tpu7x:2x2x1
jax: 0.10.0
libtpu: 0.0.40
codegen_flags: <defaults>
</compile_context>

<pallas_src>
import functools

import jax
import jax.numpy as jnp
import numpy as np
from jax.experimental import pallas as pl
from jax.experimental.pallas import tpu as pltpu

VMEM_LIMIT = 48 * 1024 * 1024   # explicit: v5e scoped default is only 16 MiB;
                                # 48 MiB leaves headroom under v7x's 64 MiB.


# --------------------------------------------------------------------------
# Kernel 1: encoder stand-in (MLP + projection head) + F.normalize(dim=1)
# Grid: (2N // tm,) -- row tiles only; the full F and HIDDEN dims fit VMEM.
# --------------------------------------------------------------------------
def encoder_kernel(x_ref, w1_ref, b1_ref, w2_ref, b2_ref, zn_ref):
    # bf16 operands, f32 accumulation on the MXU.
    h = jnp.dot(x_ref[...], w1_ref[...], preferred_element_type=jnp.float32)
    h = jnp.maximum(h + b1_ref[...], 0.0)                      # bias + ReLU (f32)
    z = jnp.dot(h.astype(jnp.bfloat16), w2_ref[...],
                preferred_element_type=jnp.float32) + b2_ref[...]
    # F.normalize(rep, dim=1), eps=1e-12  ==  z * rsqrt(max(||z||^2, 1e-24))
    ssq = jnp.sum(z * z, axis=-1, keepdims=True)
    inv_norm = jax.lax.rsqrt(jnp.maximum(ssq, jnp.float32(1e-24)))
    zn_ref[...] = (z * inv_norm).astype(zn_ref.dtype)


def simclr_encode(x_views, w1, b1, w2, b2, *, tm=128):
    """x_views: (2N, F) bf16; returns L2-normalized embeddings (2N, EMBED) bf16."""
    m2, f = x_views.shape
    hidden = w1.shape[1]
    embed = w2.shape[1]
    assert w1.shape[0] == f and w2.shape[0] == hidden
    assert m2 % tm == 0, (m2, tm)

    return pl.pallas_call(
        encoder_kernel,
        out_shape=jax.ShapeDtypeStruct((m2, embed), jnp.bfloat16),
        grid_spec=pltpu.PrefetchScalarGridSpec(
            num_scalar_prefetch=0,
            grid=(m2 // tm,),
            in_specs=[
                pl.BlockSpec((tm, f), lambda m: (m, 0)),          # x tile
                pl.BlockSpec((f, hidden), lambda m: (0, 0)),      # w1 (full)
                pl.BlockSpec((1, hidden), lambda m: (0, 0)),      # b1 (full)
                pl.BlockSpec((hidden, embed), lambda m: (0, 0)),  # w2 (full)
                pl.BlockSpec((1, embed), lambda m: (0, 0)),       # b2 (full)
            ],
            out_specs=pl.BlockSpec((tm, embed), lambda m: (m, 0)),
        ),
        compiler_params=pltpu.CompilerParams(
            dimension_semantics=("parallel",),
            vmem_limit_bytes=VMEM_LIMIT,
        ),
    )(x_views, w1, b1, w2, b2)


# --------------------------------------------------------------------------
# Kernel 2: NT-Xent loss, flash-style tiled online logsumexp.
# Grid: (num_q_tiles, num_k_tiles); k is the reduction axis ("arbitrary").
# Positive pair rows arrive via a roll-by-N index_map on the third input.
# --------------------------------------------------------------------------
def ntxent_kernel(q_ref, k_ref, p_ref, loss_ref, m_scr, l_scr, pos_scr, *, temp):
    qi = pl.program_id(0)
    ki = pl.program_id(1)
    inv_t = jnp.float32(1.0 / temp)
    tq, tk = q_ref.shape[0], k_ref.shape[0]

    @pl.when(ki == 0)
    def _():
        m_scr[...] = jnp.full_like(m_scr, -jnp.inf)
        l_scr[...] = jnp.zeros_like(l_scr)
        # Positive logit: <zn_i, zn_{(i+N) % 2N}> / temp, from the same bf16
        # values the MXU sees, summed in f32.
        qf = q_ref[...].astype(jnp.float32)
        pf = p_ref[...].astype(jnp.float32)
        pos_scr[...] = jnp.sum(qf * pf, axis=-1, keepdims=True) * inv_t

    # bf16 MXU dot with f32 accumulation; 1/temp applied to the f32 result.
    s = jax.lax.dot_general(q_ref[...], k_ref[...], (((1,), (1,)), ((), ())),
                            preferred_element_type=jnp.float32) * inv_t

    # Mask self-similarity (diagonal); tile-local iota only (the compare only
    # hits on the q_tile == k_tile block, elsewhere it is an identity select).
    row = jax.lax.broadcasted_iota(jnp.int32, (tq, tk), 0) + qi * tq
    col = jax.lax.broadcasted_iota(jnp.int32, (tq, tk), 1) + ki * tk
    s = jnp.where(row == col, jnp.float32(-1e30), s)

    # Online logsumexp update.
    m_prev = m_scr[...]
    m_new = jnp.maximum(m_prev, jnp.max(s, axis=-1, keepdims=True))
    alpha = jnp.exp(m_prev - m_new)
    l_scr[...] = alpha * l_scr[...] + jnp.sum(jnp.exp(s - m_new), axis=-1,
                                              keepdims=True)
    m_scr[...] = m_new

    @pl.when(ki == pl.num_programs(1) - 1)
    def _():
        lse = m_scr[...] + jnp.log(l_scr[...])
        loss_ref[...] = lse - pos_scr[...]          # per-row CE loss


def ntxent_loss(zn, n, *, temp, tq=128, tk=128):
    m2, e = zn.shape
    assert m2 == 2 * n
    assert m2 % tq == 0 and m2 % tk == 0, (m2, tq, tk)
    assert n % tq == 0, "roll-by-N positive pairing requires tq to divide N"
    num_q = m2 // tq
    num_k = m2 // tk
    half = num_q // 2

    kernel = functools.partial(ntxent_kernel, temp=temp)
    per_row = pl.pallas_call(
        kernel,
        out_shape=jax.ShapeDtypeStruct((m2, 1), jnp.float32),
        grid_spec=pltpu.PrefetchScalarGridSpec(
            num_scalar_prefetch=0,
            grid=(num_q, num_k),
            in_specs=[
                pl.BlockSpec((tq, e), lambda qi, ki: (qi, 0)),               # q rows
                pl.BlockSpec((tk, e), lambda qi, ki: (ki, 0)),               # key rows
                pl.BlockSpec((tq, e), lambda qi, ki: ((qi + half) % num_q, 0)),  # positive rows
            ],
            out_specs=pl.BlockSpec((tq, 1), lambda qi, ki: (qi, 0)),
            scratch_shapes=[pltpu.VMEM((tq, 1), jnp.float32),   # running max
                            pltpu.VMEM((tq, 1), jnp.float32),   # running sum
                            pltpu.VMEM((tq, 1), jnp.float32)],  # positive logit
        ),
        compiler_params=pltpu.CompilerParams(
            dimension_semantics=("parallel", "arbitrary"),
            vmem_limit_bytes=VMEM_LIMIT,
        ),
    )(zn, zn, zn)
    # Tiny final reduction (2N scalars) in plain JAX: sum-CE / 2N.
    return jnp.sum(per_row) / jnp.float32(m2)


def simclr_loss(x_views_bf16, w1_bf16, b1, w2_bf16, b2, *, temp,
                tm=128, tq=128, tk=128):
    zn = simclr_encode(x_views_bf16, w1_bf16, b1, w2_bf16, b2, tm=tm)
    n = x_views_bf16.shape[0] // 2
    return ntxent_loss(zn, n, temp=temp, tq=tq, tk=tk)


# --------------------------------------------------------------------------
# Pure numpy reference following the PyTorch forward order literally.
# --------------------------------------------------------------------------
def _f64(a):
    return np.asarray(jnp.asarray(a, jnp.float32), np.float64)


def _reference_loss(x, w1, b1, w2, b2, temp):
    x, w1, b1, w2, b2 = _f64(x), _f64(w1), _f64(b1), _f64(w2), _f64(b2)
    h = np.maximum(x @ w1 + b1, 0.0)
    rep = h @ w2 + b2
    rep = rep / np.maximum(np.linalg.norm(rep, axis=1, keepdims=True), 1e-12)
    sim = rep @ rep.T
    m2 = sim.shape[0]
    n = m2 // 2
    positive = np.concatenate([np.diag(sim, n), np.diag(sim, -n)])[:, None]
    mask = np.diag(np.ones(n), n) + np.diag(np.ones(n), -n) + np.eye(m2)
    mask = (1.0 - mask).astype(bool)
    negative = sim[mask].reshape(m2, -1)
    assert negative.shape[-1] == 2 * (n - 1)
    logits = np.concatenate([positive, negative], axis=1) / temp
    mx = logits.max(axis=1, keepdims=True)
    lse = (mx + np.log(np.exp(logits - mx).sum(axis=1, keepdims=True)))[:, 0]
    return float(np.sum(lse - logits[:, 0]) / m2)


if __name__ == "__main__":
    # Small shapes consistent with the module (samples: NHWC).
    N, H, W, C = 128, 16, 16, 3        # 2N = 256 rows -> two 128-row tiles
    HIDDEN, EMBED = 256, 256           # MLP encoder stand-in for ResNetSimCLR
    TEMP = 0.8

    key = jax.random.PRNGKey(0)
    k_x, k_j1, k_j2, k_w1, k_b1, k_w2, k_b2 = jax.random.split(key, 7)

    samples = jax.random.uniform(k_x, (N, H, W, C), dtype=jnp.float32)

    # Deterministic stand-in for the two random augmentations (see TODO above).
    x_t1 = samples + 0.05 * jax.random.normal(k_j1, samples.shape, jnp.float32)
    x_t2 = samples + 0.05 * jax.random.normal(k_j2, samples.shape, jnp.float32)

    feat = H * W * C                   # 768
    x_views = jnp.concatenate(
        [x_t1.reshape(N, feat), x_t2.reshape(N, feat)], axis=0)       # (2N, F)

    # Deterministic parameter init (encoder + projection head).
    w1 = jax.random.normal(k_w1, (feat, HIDDEN), jnp.float32) / np.sqrt(feat)
    b1 = jax.random.normal(k_b1, (1, HIDDEN), jnp.float32) * 0.01
    w2 = jax.random.normal(k_w2, (HIDDEN, EMBED), jnp.float32) / np.sqrt(HIDDEN)
    b2 = jax.random.normal(k_b2, (1, EMBED), jnp.float32) * 0.01

    # bf16 matmul operands (halves HBM->VMEM bytes; f32 MXU accumulation).
    x_bf = x_views.astype(jnp.bfloat16)
    w1_bf = w1.astype(jnp.bfloat16)
    w2_bf = w2.astype(jnp.bfloat16)

    loss = simclr_loss(x_bf, w1_bf, b1, w2_bf, b2, temp=TEMP,
                       tm=128, tq=128, tk=128)
    loss = float(jax.block_until_ready(loss))

    ref = _reference_loss(x_bf, w1_bf, b1, w2_bf, b2, TEMP)
    # bf16 matmul operands -> tolerance loosened vs an all-f32 version.
    assert np.allclose(loss, ref, rtol=1e-2, atol=1e-2), f"kernel={loss} ref={ref}"

    print("KERNEL_OK")
</pallas_src>

<mosaic_0001>
module attributes {stable_mosaic.version = 11 : i64} {
  func.func @encoder_kernel(%arg0: i32, %arg1: memref<128x768xbf16, #tpu.memory_space<vmem>>, %arg2: memref<768x256xbf16, #tpu.memory_space<vmem>>, %arg3: memref<1x256xf32, #tpu.memory_space<vmem>>, %arg4: memref<256x256xbf16, #tpu.memory_space<vmem>>, %arg5: memref<1x256xf32, #tpu.memory_space<vmem>>, %arg6: memref<128x256xbf16, #tpu.memory_space<vmem>>) attributes {dimension_semantics = [#tpu.dimension_semantics<parallel>], iteration_bounds = array<i64: 2>, scalar_prefetch = 0 : i64, scratch_operands = 0 : i64, tpu.core_type = #tpu.core_type<tc>, window_params = [{transform_indices = @transform_0, window_bounds = array<i64: 128, 768>}, {pipeline_mode = #tpu.pipeline_mode<synchronous>, transform_indices = @transform_1, window_bounds = array<i64: 768, 256>}, {pipeline_mode = #tpu.pipeline_mode<synchronous>, transform_indices = @transform_2, window_bounds = array<i64: 1, 256>}, {pipeline_mode = #tpu.pipeline_mode<synchronous>, transform_indices = @transform_3, window_bounds = array<i64: 256, 256>}, {pipeline_mode = #tpu.pipeline_mode<synchronous>, transform_indices = @transform_4, window_bounds = array<i64: 1, 256>}, {transform_indices = @transform_5, window_bounds = array<i64: 128, 256>}]} {
    %c0 = arith.constant 0 : index
    %c0_0 = arith.constant 0 : index
    %0 = vector.load %arg1[%c0, %c0_0] : memref<128x768xbf16, #tpu.memory_space<vmem>>, vector<128x768xbf16>
    %c0_1 = arith.constant 0 : index
    %c0_2 = arith.constant 0 : index
    %1 = vector.load %arg2[%c0_1, %c0_2] : memref<768x256xbf16, #tpu.memory_space<vmem>>, vector<768x256xbf16>
    %cst = arith.constant dense<0.000000e+00> : vector<128x256xf32>
    %2 = tpu.matmul %0, %1, %cst {dimension_numbers = #tpu.dot_dimension_numbers<[1], [0], [0], [1], [0, 0, 1, 1], [], []>} : vector<128x768xbf16>, vector<768x256xbf16>, vector<128x256xf32> -> vector<128x256xf32>
    %c0_3 = arith.constant 0 : index
    %c0_4 = arith.constant 0 : index
    %3 = vector.load %arg3[%c0_3, %c0_4] : memref<1x256xf32, #tpu.memory_space<vmem>>, vector<1x256xf32>
    %4 = vector.broadcast %3 : vector<1x256xf32> to vector<128x256xf32>
    %5 = arith.addf %2, %4 : vector<128x256xf32>
    %cst_5 = arith.constant 0.000000e+00 : f32
    %6 = vector.broadcast %cst_5 : f32 to vector<128x256xf32>
    %7 = arith.maximumf %5, %6 : vector<128x256xf32>
    %8 = arith.truncf %7 : vector<128x256xf32> to vector<128x256xbf16>
    %c0_6 = arith.constant 0 : index
    %c0_7 = arith.constant 0 : index
    %9 = vector.load %arg4[%c0_6, %c0_7] : memref<256x256xbf16, #tpu.memory_space<vmem>>, vector<256x256xbf16>
    %cst_8 = arith.constant dense<0.000000e+00> : vector<128x256xf32>
    %10 = tpu.matmul %8, %9, %cst_8 {dimension_numbers = #tpu.dot_dimension_numbers<[1], [0], [0], [1], [0, 0, 1, 1], [], []>} : vector<128x256xbf16>, vector<256x256xbf16>, vector<128x256xf32> -> vector<128x256xf32>
    %c0_9 = arith.constant 0 : index
    %c0_10 = arith.constant 0 : index
    %11 = vector.load %arg5[%c0_9, %c0_10] : memref<1x256xf32, #tpu.memory_space<vmem>>, vector<1x256xf32>
    %12 = vector.broadcast %11 : vector<1x256xf32> to vector<128x256xf32>
    %13 = arith.addf %10, %12 : vector<128x256xf32>
    %14 = arith.mulf %13, %13 : vector<128x256xf32>
    %cst_11 = arith.constant dense<0.000000e+00> : vector<128xf32>
    %15 = vector.multi_reduction <add>, %14, %cst_11 [1] : vector<128x256xf32> to vector<128xf32>
    %16 = vector.shape_cast %15 : vector<128xf32> to vector<128x1xf32>
    %cst_12 = arith.constant 1.000000e-24 : f32
    %17 = vector.broadcast %cst_12 : f32 to vector<128x1xf32>
    %18 = arith.maximumf %16, %17 : vector<128x1xf32>
    %19 = math.rsqrt %18 : vector<128x1xf32>
    %20 = vector.broadcast %19 : vector<128x1xf32> to vector<128x256xf32>
    %21 = arith.mulf %13, %20 : vector<128x256xf32>
    %22 = arith.truncf %21 : vector<128x256xf32> to vector<128x256xbf16>
    %c0_13 = arith.constant 0 : index
    %c0_14 = arith.constant 0 : index
    %23 = vector.load %arg6[%c0_13, %c0_14] : memref<128x256xbf16, #tpu.memory_space<vmem>>, vector<128x256xbf16>
    tpu.vector_store %arg6[%c0_13, %c0_14], %22 {strides = array<i32>} : memref<128x256xbf16, #tpu.memory_space<vmem>>, vector<128x256xbf16>,
    return
  }
  func.func @transform_0(%arg0: i32) -> (i32, i32) {
    %c0_i32 = arith.constant 0 : i32
    %c0_i32_0 = arith.constant 0 : i32
    return %arg0, %c0_i32 : i32, i32
  }
  func.func @transform_1(%arg0: i32) -> (i32, i32) {
    %c0_i32 = arith.constant 0 : i32
    %c0_i32_0 = arith.constant 0 : i32
    %c0_i32_1 = arith.constant 0 : i32
    return %c0_i32, %c0_i32_0 : i32, i32
  }
  func.func @transform_2(%arg0: i32) -> (i32, i32) {
    %c0_i32 = arith.constant 0 : i32
    %c0_i32_0 = arith.constant 0 : i32
    %c0_i32_1 = arith.constant 0 : i32
    return %c0_i32, %c0_i32_0 : i32, i32
  }
  func.func @transform_3(%arg0: i32) -> (i32, i32) {
    %c0_i32 = arith.constant 0 : i32
    %c0_i32_0 = arith.constant 0 : i32
    %c0_i32_1 = arith.constant 0 : i32
    return %c0_i32, %c0_i32_0 : i32, i32
  }
  func.func @transform_4(%arg0: i32) -> (i32, i32) {
    %c0_i32 = arith.constant 0 : i32
    %c0_i32_0 = arith.constant 0 : i32
    %c0_i32_1 = arith.constant 0 : i32
    return %c0_i32, %c0_i32_0 : i32, i32
  }
  func.func @transform_5(%arg0: i32) -> (i32, i32) {
    %c0_i32 = arith.constant 0 : i32
    %c0_i32_0 = arith.constant 0 : i32
    return %arg0, %c0_i32 : i32, i32
  }
}

</mosaic_0001>

<llo_original>
// kernel: tpu_custom_call.1
$region0: #{tpu_custom_call.1}
  #allocation0 [shape = 'u32[]', space=smem, size = 0x4, offset = 0x4, fixed_abs, tag = 'smem constant byte address 0x4 - core index']
  #allocation1 [shape = 'u32[144,128]{1,0:T(1,128)}', space=vmem, size = 0x12000, scoped, tag = 'internal scratch']
  %s0 = inlined_call_operand.hbm [shape: bf16[256,768], index: 0, kind: input, shape index: {}]
  %s1 = inlined_call_operand.hbm [shape: bf16[768,256], index: 1, kind: input, shape index: {}]
  %s2 = inlined_call_operand.vmem [shape: f32[1,256], index: 2, kind: input, shape index: {}]
  %s3 = inlined_call_operand.hbm [shape: bf16[256,256], index: 3, kind: input, shape index: {}]
  %s4 = inlined_call_operand.vmem [shape: f32[1,256], index: 4, kind: input, shape index: {}]
  %s5 = inlined_call_operand.hbm [shape: bf16[256,256], index: 5, kind: output, shape index: {}]
  %s6 = sld [smem:[#allocation0]]
  $region65: #{tpu_custom_call.1} parent=0
    _
  %s8 = ssub.s32 1, %s6
  %s9 = scalar_select 0, %s8, %s6
  $region1: #{tpu_custom_call.1} parent=0
    #allocation2 [shape = 'u8[393216]{0}', space=vmem, size = 0x60000, scoped, tag = 'input window, operand 0']
    #allocation3 [shape = 's32[2]{0}', space=sflag, size = 0x8, scoped, tag = 'scoped memory for tpu_custom_call.1']
    #allocation4 [shape = 's32[2]{0}', space=sflag, size = 0x8, scoped, tag = 'scoped memory for tpu_custom_call.1']
    #allocation5 [shape = 'u8[393216]{0}', space=vmem, size = 0x60000, scoped, tag = 'input window, operand 1, single buffered']
    #allocation6 [shape = 's32[1]{0}', space=sflag, size = 0x4, scoped, tag = 'scoped memory for tpu_custom_call.1']
    #allocation7 [shape = 'u8[131072]{0}', space=vmem, size = 0x20000, scoped, tag = 'input window, operand 3, single buffered']
    #allocation8 [shape = 'u8[131072]{0}', space=vmem, size = 0x20000, scoped, tag = 'output window, operand 0']
    %10 = vsyncpa [#allocation3], 0
    %s11 = scalar_lea.sflag [#allocation3], 1
    %12 = vsyncpa %s11, 0
    %13 = vsyncpa [#allocation6], 0
    %14 = vsyncpa [#allocation4], 0
    %s15 = scalar_lea.sflag [#allocation4], 1
    %16 = vsyncpa %s15, 0
    loop: start=0, step=1, limit=4
    $region2: #{tpu_custom_call.1} parent=1 // loop_pre_header
      _
    $region3: #{tpu_custom_call.1} parent=1 // loop_header
      %s18 = sphi 0, %s22
      %p19 = scmp.ge.s32.totalorder %s18, 4
      %s28 = sphi 0, %s30
      %s31 = sphi 0, %s28
      %s32 = sphi 0, %s31
      %s48 = sphi 0, %s32
      %s52 = sphi 0, %s52
      %s54 = sphi 0, %s52
      %s55 = sphi 0, %s54
      %s69 = sphi 0, %s55
      %s73 = sphi 0, %s73
      %s75 = sphi 0, %s73
      %s76 = sphi 0, %s75
      %s90 = sphi 0, %s76
      %s94 = sphi 0, %s94
      %s96 = sphi 0, %s94
      %s97 = sphi 0, %s96
      %s111 = sphi 0, %s97
      %s115 = sphi 0, %s115
      %s117 = sphi 0, %s115
      %s118 = sphi 0, %s117
      %s132 = sphi 0, %s118
      %s138 = sphi 0, %s140
      %s141 = sphi 0, %s138
      %s142 = sphi 0, %s141
      %s158 = sphi 0, %s142
    $region4: #{tpu_custom_call.1} parent=1 // loop_header_branch
      %21 = sbr.rel (%p19) target = $region8
    $region5: #{tpu_custom_call.1} parent=1 // loop_body
      %s23 = ssub.s32 %s18, 1
      %s24 = ssub.s32 %s18, 2
      %s25 = sadd.s32 %s18, 1
      %s26 = ssub.s32 %s18, %s25
      %p27 = scmp.eq.s32.totalorder %s26, 0
      %s29 = sadd.s32 %s28, 1
      %s30 = scalar_select %p27, %s28, %s29
      %p33 = pneg %p27
      %p34 = scmp.eq.s32.totalorder %s18, 1
      %p35 = por %p33, %p34
      %p36 = scmp.ne.s32.totalorder %s28, %s31
      %p37 = scmp.eq.s32.totalorder %s18, 0
      %p38 = por %p36, %p37
      %p39 = scmp.ne.s32.totalorder %s28, %s31
      %p40 = scmp.eq.s32.totalorder %s23, 1
      %p41 = por %p39, %p40
      %p42 = scmp.ne.s32.totalorder %s31, %s32
      %p43 = scmp.eq.s32.totalorder %s23, 0
      %p44 = por %p42, %p43
      %p45 = scmp.ne.s32.totalorder %s31, %s32
      %p46 = scmp.eq.s32.totalorder %s24, 1
      %p47 = por %p45, %p46
      %p49 = scmp.ne.s32.totalorder %s32, %s48
      %p50 = scmp.eq.s32.totalorder %s24, 0
      %p51 = por %p49, %p50
      %s53 = sadd.s32 %s52, 1
      %p56 = scmp.eq.s32.totalorder %s18, 1
      %p57 = scmp.ne.s32.totalorder %s52, %s54
      %p58 = scmp.eq.s32.totalorder %s18, 0
      %p59 = por %p57, %p58
      %p60 = scmp.ne.s32.totalorder %s52, %s54
      %p61 = scmp.eq.s32.totalorder %s23, 1
      %p62 = por %p60, %p61
      %p63 = scmp.ne.s32.totalorder %s54, %s55
      %p64 = scmp.eq.s32.totalorder %s23, 0
      %p65 = por %p63, %p64
      %p66 = scmp.ne.s32.totalorder %s54, %s55
      %p67 = scmp.eq.s32.totalorder %s24, 1
      %p68 = por %p66, %p67
      %p70 = scmp.ne.s32.totalorder %s55, %s69
      %p71 = scmp.eq.s32.totalorder %s24, 0
      %p72 = por %p70, %p71
      %s74 = sadd.s32 %s73, 1
      %p77 = scmp.eq.s32.totalorder %s18, 1
      %p78 = scmp.ne.s32.totalorder %s73, %s75
      %p79 = scmp.eq.s32.totalorder %s18, 0
      %p80 = por %p78, %p79
      %p81 = scmp.ne.s32.totalorder %s73, %s75
      %p82 = scmp.eq.s32.totalorder %s23, 1
      %p83 = por %p81, %p82
      %p84 = scmp.ne.s32.totalorder %s75, %s76
      %p85 = scmp.eq.s32.totalorder %s23, 0
      %p86 = por %p84, %p85
      %p87 = scmp.ne.s32.totalorder %s75, %s76
      %p88 = scmp.eq.s32.totalorder %s24, 1
      %p89 = por %p87, %p88
      %p91 = scmp.ne.s32.totalorder %s76, %s90
      %p92 = scmp.eq.s32.totalorder %s24, 0
      %p93 = por %p91, %p92
      %s95 = sadd.s32 %s94, 1
      %p98 = scmp.eq.s32.totalorder %s18, 1
      %p99 = scmp.ne.s32.totalorder %s94, %s96
      %p100 = scmp.eq.s32.totalorder %s18, 0
      %p101 = por %p99, %p100
      %p102 = scmp.ne.s32.totalorder %s94, %s96
      %p103 = scmp.eq.s32.totalorder %s23, 1
      %p104 = por %p102, %p103
      %p105 = scmp.ne.s32.totalorder %s96, %s97
      %p106 = scmp.eq.s32.totalorder %s23, 0
      %p107 = por %p105, %p106
      %p108 = scmp.ne.s32.totalorder %s96, %s97
      %p109 = scmp.eq.s32.totalorder %s24, 1
      %p110 = por %p108, %p109
      %p112 = scmp.ne.s32.totalorder %s97, %s111
      %p113 = scmp.eq.s32.totalorder %s24, 0
      %p114 = por %p112, %p113
      %s116 = sadd.s32 %s115, 1
      %p119 = scmp.eq.s32.totalorder %s18, 1
      %p120 = scmp.ne.s32.totalorder %s115, %s117
      %p121 = scmp.eq.s32.totalorder %s18, 0
      %p122 = por %p120, %p121
      %p123 = scmp.ne.s32.totalorder %s115, %s117
      %p124 = scmp.eq.s32.totalorder %s23, 1
      %p125 = por %p123, %p124
      %p126 = scmp.ne.s32.totalorder %s117, %s118
      %p127 = scmp.eq.s32.totalorder %s23, 0
      %p128 = por %p126, %p127
      %p129 = scmp.ne.s32.totalorder %s117, %s118
      %p130 = scmp.eq.s32.totalorder %s24, 1
      %p131 = por %p129, %p130
      %p133 = scmp.ne.s32.totalorder %s118, %s132
      %p134 = scmp.eq.s32.totalorder %s24, 0
      %p135 = por %p133, %p134
      %s136 = ssub.s32 %s18, %s25
      %p137 = scmp.eq.s32.totalorder %s136, 0
      %s139 = sadd.s32 %s138, 1
      %s140 = scalar_select %p137, %s138, %s139
      %p143 = pneg %p137
      %p144 = scmp.eq.s32.totalorder %s18, 1
      %p145 = por %p143, %p144
      %p146 = scmp.ne.s32.totalorder %s138, %s141
      %p147 = scmp.eq.s32.totalorder %s18, 0
      %p148 = por %p146, %p147
      %p149 = scmp.ne.s32.totalorder %s138, %s141
      %p150 = scmp.eq.s32.totalorder %s23, 1
      %p151 = por %p149, %p150
      %p152 = scmp.ne.s32.totalorder %s141, %s142
      %p153 = scmp.eq.s32.totalorder %s23, 0
      %p154 = por %p152, %p153
      %p155 = scmp.ne.s32.totalorder %s141, %s142
      %p156 = scmp.eq.s32.totalorder %s24, 1
      %p157 = por %p155, %p156
      %p159 = scmp.ne.s32.totalorder %s142, %s158
      %p160 = scmp.eq.s32.totalorder %s24, 0
      %p161 = por %p159, %p160
      %p162 = scmp.le.s32.totalorder 1, %s18
      %p163 = scmp.lt.s32.totalorder %s18, 3
      %p164 = pnand %p162, %p163
      %p165 = pneg %p164
      // Predicated region
      $region9: #{tpu_custom_call.1} parent=5 // pred_check
        _
      $region10: #{tpu_custom_call.1} parent=5 // pred_check_branch
        %167 = sbr.rel (%p164) target = $region12
      $region11: #{tpu_custom_call.1} parent=5 // pred_region
        %s168 = ssub.s32 %s18, 1
        // Predicated region
        $region13: #{tpu_custom_call.1} parent=11 // pred_check
          %p169 = pneg %p65
        $region14: #{tpu_custom_call.1} parent=11 // pred_check_branch
          %171 = sbr.rel (%p169) target = $region16
        $region15: #{tpu_custom_call.1} parent=11 // pred_region
          %s173 = ssub.s32 12288, 12288
          %174 = vsyncadd [#allocation6], %s173
          %s175 = sshll.u32 [#allocation5], 4
          %s176 = int_to_ptr.vmem [resolvable:$true] %s175
          %181 = dma.hbm_to_vmem [thread:$0]  %s1, 12288, %s176, [#allocation6], 128, 128, 8
        $region16: #{tpu_custom_call.1} parent=11 // pred_fallthru
          _
        // Predicated region
        $region17: #{tpu_custom_call.1} parent=11 // pred_check
          %p182 = pneg %p86
        $region18: #{tpu_custom_call.1} parent=11 // pred_check_branch
          %184 = sbr.rel (%p182) target = $region20
        $region19: #{tpu_custom_call.1} parent=11 // pred_region
          _
        $region20: #{tpu_custom_call.1} parent=11 // pred_fallthru
          _
        // Predicated region
        $region21: #{tpu_custom_call.1} parent=11 // pred_check
          %p185 = pneg %p107
        $region22: #{tpu_custom_call.1} parent=11 // pred_check_branch
          %187 = sbr.rel (%p185) target = $region24
        $region23: #{tpu_custom_call.1} parent=11 // pred_region
          %s189 = ssub.s32 4096, 4096
          %190 = vsyncadd [#allocation6], %s189
          %s191 = sshll.u32 [#allocation7], 4
          %s192 = int_to_ptr.vmem [resolvable:$true] %s191
          %197 = dma.hbm_to_vmem [thread:$0]  %s3, 4096, %s192, [#allocation6], 128, 128, 8
        $region24: #{tpu_custom_call.1} parent=11 // pred_fallthru
          _
        // Predicated region
        $region25: #{tpu_custom_call.1} parent=11 // pred_check
          %p198 = pneg %p128
        $region26: #{tpu_custom_call.1} parent=11 // pred_check_branch
          %200 = sbr.rel (%p198) target = $region28
        $region27: #{tpu_custom_call.1} parent=11 // pred_region
          _
        $region28: #{tpu_custom_call.1} parent=11 // pred_fallthru
          _
      $region12: #{tpu_custom_call.1} parent=5 // pred_fallthru
        _
      %p201 = scmp.lt.s32.totalorder %s18, 2
      // Predicated region
      $region29: #{tpu_custom_call.1} parent=5 // pred_check
        %p202 = pneg %p201
      $region30: #{tpu_custom_call.1} parent=5 // pred_check_branch
        %204 = sbr.rel (%p202) target = $region32
      $region31: #{tpu_custom_call.1} parent=5 // pred_region
        // Predicated region
        $region33: #{tpu_custom_call.1} parent=31 // pred_check
          %p205 = pneg %p38
        $region34: #{tpu_custom_call.1} parent=31 // pred_check_branch
          %207 = sbr.rel (%p205) target = $region36
        $region35: #{tpu_custom_call.1} parent=31 // pred_region
          %s208 = sand.u32 %s28, 1
          %s209 = scalar_lea.sflag [#allocation3], %s208
          %s210 = sand.u32 %s28, 1
          %s211 = smul.addr %s210, 384
          %s212 = scalar_lea.vmem [#allocation2], %s211
          %s213 = smul.u32 16, %s18
          %s215 = ssub.s32 6144, 6144
          %216 = vsyncadd %s209, %s215
          %s217 = smul.addr %s213, 6
          %s218 = smul.addr %s217, 64
          %s219 = scalar_lea.hbm %s0, %s218
          %s220 = sshll.u32 %s212, 4
          %s221 = int_to_ptr.vmem [resolvable:$true] %s220
          %226 = dma.hbm_to_vmem [thread:$0]  %s219, 6144, %s221, %s209, 384, 384, 24
        $region36: #{tpu_custom_call.1} parent=31 // pred_fallthru
          _
      $region32: #{tpu_custom_call.1} parent=5 // pred_fallthru
        _
      %p227 = scmp.le.s32.totalorder 1, %s18
      %p228 = scmp.lt.s32.totalorder %s18, 3
      %p229 = pnand %p227, %p228
      %p230 = pneg %p229
      // Predicated region
      $region37: #{tpu_custom_call.1} parent=5 // pred_check
        _
      $region38: #{tpu_custom_call.1} parent=5 // pred_check_branch
        %232 = sbr.rel (%p229) target = $region40
      $region39: #{tpu_custom_call.1} parent=5 // pred_region
        %s233 = ssub.s32 %s18, 1
        %s234 = sand.u32 %s31, 1
        %s235 = scalar_lea.sflag [#allocation3], %s234
        %s236 = sand.u32 %s31, 1
        %s237 = smul.addr %s236, 384
        %s238 = scalar_lea.vmem [#allocation2], %s237
        // Predicated region
        $region41: #{tpu_custom_call.1} parent=39 // pred_check
          %p239 = pneg %p44
        $region42: #{tpu_custom_call.1} parent=39 // pred_check_branch
          %241 = sbr.rel (%p239) target = $region44
        $region43: #{tpu_custom_call.1} parent=39 // pred_region
          %242 = dma.done %s235, 6144
        $region44: #{tpu_custom_call.1} parent=39 // pred_fallthru
          _
        // Predicated region
        $region45: #{tpu_custom_call.1} parent=39 // pred_check
          %p243 = pneg %p65
        $region46: #{tpu_custom_call.1} parent=39 // pred_check_branch
          %245 = sbr.rel (%p243) target = $region48
        $region47: #{tpu_custom_call.1} parent=39 // pred_region
          %246 = dma.done [#allocation6], 12288
        $region48: #{tpu_custom_call.1} parent=39 // pred_fallthru
          _
        // Predicated region
        $region49: #{tpu_custom_call.1} parent=39 // pred_check
          %p247 = pneg %p107
        $region50: #{tpu_custom_call.1} parent=39 // pred_check_branch
          %249 = sbr.rel (%p247) target = $region52
        $region51: #{tpu_custom_call.1} parent=39 // pred_region
          %250 = dma.done [#allocation6], 4096
        $region52: #{tpu_custom_call.1} parent=39 // pred_fallthru
          _
        %s251 = sand.u32 %s31, 1
        %s252 = scalar_lea.sflag [#allocation3], %s251
        %s253 = sand.u32 %s31, 1
        %s254 = smul.addr %s253, 384
        %s255 = scalar_lea.vmem [#allocation2], %s254
        %p256 = pneg %p44
        %p257 = pneg %p41
        %p258 = pneg %p65
        %p259 = pneg %p62
        %p260 = pneg %p86
        %p261 = pneg %p83
        %p262 = pneg %p107
        %p263 = pneg %p104
        %p264 = pneg %p128
        %p265 = pneg %p125
        %p266 = pneg %p154
        %p267 = pneg %p151
        %s268 = sand.u32 %s141, 1
        %s269 = scalar_lea.sflag [#allocation4], %s268
        %s270 = sand.u32 %s141, 1
        %s271 = smul.addr %s270, 128
        %s272 = scalar_lea.vmem [#allocation8], %s271
        %s273 = smul.u32 16, %s23
        %s274 = smul.u32 16, %s23
        %v275 = vld [vmem:[%s238] sm:$0xff]
        %v276 = vld [vmem:[%s238 + $0x8] sm:$0xff]
        %v277 = vld [vmem:[%s238 + $0x10] sm:$0xff]
        %v278 = vld [vmem:[%s238 + $0x18] sm:$0xff]
        %v279 = vld [vmem:[%s238 + $0x20] sm:$0xff]
        %v280 = vld [vmem:[%s238 + $0x28] sm:$0xff]
        %v281 = vld [vmem:[%s238 + $0x30] sm:$0xff]
        %v282 = vld [vmem:[%s238 + $0x38] sm:$0xff]
        %v283 = vld [vmem:[%s238 + $0x40] sm:$0xff]
        %v284 = vld [vmem:[%s238 + $0x48] sm:$0xff]
        %v285 = vld [vmem:[%s238 + $0x50] sm:$0xff]
        %v286 = vld [vmem:[%s238 + $0x58] sm:$0xff]
        %v287 = vld [vmem:[%s238 + $0x60] sm:$0xff]
        %v288 = vld [vmem:[%s238 + $0x68] sm:$0xff]
        %v289 = vld [vmem:[%s238 + $0x70] sm:$0xff]
        %v290 = vld [vmem:[%s238 + $0x78] sm:$0xff]
        %v291 = vld [vmem:[%s238 + $0x80] sm:$0xff]
        %v292 = vld [vmem:[%s238 + $0x88] sm:$0xff]
        %v293 = vld [vmem:[%s238 + $0x90] sm:$0xff]
        %v294 = vld [vmem:[%s238 + $0x98] sm:$0xff]
        %v295 = vld [vmem:[%s238 + $0xa0] sm:$0xff]
        %v296 = vld [vmem:[%s238 + $0xa8] sm:$0xff]
        %v297 = vld [vmem:[%s238 + $0xb0] sm:$0xff]
        %v298 = vld [vmem:[%s238 + $0xb8] sm:$0xff]
        %v299 = vld [vmem:[%s238 + $0xc0] sm:$0xff]
        %v300 = vld [vmem:[%s238 + $0xc8] sm:$0xff]
        %v301 = vld [vmem:[%s238 + $0xd0] sm:$0xff]
        %v302 = vld [vmem:[%s238 + $0xd8] sm:$0xff]
        %v303 = vld [vmem:[%s238 + $0xe0] sm:$0xff]
        %v304 = vld [vmem:[%s238 + $0xe8] sm:$0xff]
        %v305 = vld [vmem:[%s238 + $0xf0] sm:$0xff]
        %v306 = vld [vmem:[%s238 + $0xf8] sm:$0xff]
        %v307 = vld [vmem:[%s238 + $0x100] sm:$0xff]
        %v308 = vld [vmem:[%s238 + $0x108] sm:$0xff]
        %v309 = vld [vmem:[%s238 + $0x110] sm:$0xff]
        %v310 = vld [vmem:[%s238 + $0x118] sm:$0xff]
        %v311 = vld [vmem:[%s238 + $0x120] sm:$0xff]
        %v312 = vld [vmem:[%s238 + $0x128] sm:$0xff]
        %v313 = vld [vmem:[%s238 + $0x130] sm:$0xff]
        %v314 = vld [vmem:[%s238 + $0x138] sm:$0xff]
        %v315 = vld [vmem:[%s238 + $0x140] sm:$0xff]
        %v316 = vld [vmem:[%s238 + $0x148] sm:$0xff]
        %v317 = vld [vmem:[%s238 + $0x150] sm:$0xff]
        %v318 = vld [vmem:[%s238 + $0x158] sm:$0xff]
        %v319 = vld [vmem:[%s238 + $0x160] sm:$0xff]
        %v320 = vld [vmem:[%s238 + $0x168] sm:$0xff]
        %v321 = vld [vmem:[%s238 + $0x170] sm:$0xff]
        %v322 = vld [vmem:[%s238 + $0x178] sm:$0xff]
        %v323 = vld [vmem:[#allocation5] sm:$0xff]
        %v324 = vld [vmem:[#allocation5 + $0x8] sm:$0xff]
        %v325 = vld [vmem:[#allocation5 + $0x10] sm:$0xff]
        %v326 = vld [vmem:[#allocation5 + $0x18] sm:$0xff]
        %v327 = vld [vmem:[#allocation5 + $0x20] sm:$0xff]
        %v328 = vld [vmem:[#allocation5 + $0x28] sm:$0xff]
        %v329 = vld [vmem:[#allocation5 + $0x30] sm:$0xff]
        %v330 = vld [vmem:[#allocation5 + $0x38] sm:$0xff]
        %v331 = vld [vmem:[#allocation5 + $0x40] sm:$0xff]
        %v332 = vld [vmem:[#allocation5 + $0x48] sm:$0xff]
        %v333 = vld [vmem:[#allocation5 + $0x50] sm:$0xff]
        %v334 = vld [vmem:[#allocation5 + $0x58] sm:$0xff]
        %v335 = vld [vmem:[#allocation5 + $0x60] sm:$0xff]
        %v336 = vld [vmem:[#allocation5 + $0x68] sm:$0xff]
        %v337 = vld [vmem:[#allocation5 + $0x70] sm:$0xff]
        %v338 = vld [vmem:[#allocation5 + $0x78] sm:$0xff]
        %v339 = vld [vmem:[#allocation5 + $0x80] sm:$0xff]
        %v340 = vld [vmem:[#allocation5 + $0x88] sm:$0xff]
        %v341 = vld [vmem:[#allocation5 + $0x90] sm:$0xff]
        %v342 = vld [vmem:[#allocation5 + $0x98] sm:$0xff]
        %v343 = vld [vmem:[#allocation5 + $0xa0] sm:$0xff]
        %v344 = vld [vmem:[#allocation5 + $0xa8] sm:$0xff]
        %v345 = vld [vmem:[#allocation5 + $0xb0] sm:$0xff]
        %v346 = vld [vmem:[#allocation5 + $0xb8] sm:$0xff]
        %v347 = vld [vmem:[#allocation5 + $0xc0] sm:$0xff]
        %v348 = vld [vmem:[#allocation5 + $0xc8] sm:$0xff]
        %v349 = vld [vmem:[#allocation5 + $0xd0] sm:$0xff]
        %v350 = vld [vmem:[#allocation5 + $0xd8] sm:$0xff]
        %v351 = vld [vmem:[#allocation5 + $0xe0] sm:$0xff]
        %v352 = vld [vmem:[#allocation5 + $0xe8] sm:$0xff]
        %v353 = vld [vmem:[#allocation5 + $0xf0] sm:$0xff]
        %v354 = vld [vmem:[#allocation5 + $0xf8] sm:$0xff]
        %v355 = vld [vmem:[#allocation5 + $0x100] sm:$0xff]
        %v356 = vld [vmem:[#allocation5 + $0x108] sm:$0xff]
        %v357 = vld [vmem:[#allocation5 + $0x110] sm:$0xff]
        %v358 = vld [vmem:[#allocation5 + $0x118] sm:$0xff]
        %v359 = vld [vmem:[#allocation5 + $0x120] sm:$0xff]
        %v360 = vld [vmem:[#allocation5 + $0x128] sm:$0xff]
        %v361 = vld [vmem:[#allocation5 + $0x130] sm:$0xff]
        %v362 = vld [vmem:[#allocation5 + $0x138] sm:$0xff]
        %v363 = vld [vmem:[#allocation5 + $0x140] sm:$0xff]
        %v364 = vld [vmem:[#allocation5 + $0x148] sm:$0xff]
        %v365 = vld [vmem:[#allocation5 + $0x150] sm:$0xff]
        %v366 = vld [vmem:[#allocation5 + $0x158] sm:$0xff]
        %v367 = vld [vmem:[#allocation5 + $0x160] sm:$0xff]
        %v368 = vld [vmem:[#allocation5 + $0x168] sm:$0xff]
        %v369 = vld [vmem:[#allocation5 + $0x170] sm:$0xff]
        %v370 = vld [vmem:[#allocation5 + $0x178] sm:$0xff]
        %v371 = vld [vmem:[#allocation5 + $0x180] sm:$0xff]
        %v372 = vld [vmem:[#allocation5 + $0x188] sm:$0xff]
        %v373 = vld [vmem:[#allocation5 + $0x190] sm:$0xff]
        %v374 = vld [vmem:[#allocation5 + $0x198] sm:$0xff]
        %v375 = vld [vmem:[#allocation5 + $0x1a0] sm:$0xff]
        %v376 = vld [vmem:[#allocation5 + $0x1a8] sm:$0xff]
        %v377 = vld [vmem:[#allocation5 + $0x1b0] sm:$0xff]
        %v378 = vld [vmem:[#allocation5 + $0x1b8] sm:$0xff]
        %v379 = vld [vmem:[#allocation5 + $0x1c0] sm:$0xff]
        %v380 = vld [vmem:[#allocation5 + $0x1c8] sm:$0xff]
        %v381 = vld [vmem:[#allocation5 + $0x1d0] sm:$0xff]
        %v382 = vld [vmem:[#allocation5 + $0x1d8] sm:$0xff]
        %v383 = vld [vmem:[#allocation5 + $0x1e0] sm:$0xff]
        %v384 = vld [vmem:[#allocation5 + $0x1e8] sm:$0xff]
        %v385 = vld [vmem:[#allocation5 + $0x1f0] sm:$0xff]
        %v386 = vld [vmem:[#allocation5 + $0x1f8] sm:$0xff]
        %v387 = vld [vmem:[#allocation5 + $0x200] sm:$0xff]
        %v388 = vld [vmem:[#allocation5 + $0x208] sm:$0xff]
        %v389 = vld [vmem:[#allocation5 + $0x210] sm:$0xff]
        %v390 = vld [vmem:[#allocation5 + $0x218] sm:$0xff]
        %v391 = vld [vmem:[#allocation5 + $0x220] sm:$0xff]
        %v392 = vld [vmem:[#allocation5 + $0x228] sm:$0xff]
        %v393 = vld [vmem:[#allocation5 + $0x230] sm:$0xff]
        %v394 = vld [vmem:[#allocation5 + $0x238] sm:$0xff]
        %v395 = vld [vmem:[#allocation5 + $0x240] sm:$0xff]
        %v396 = vld [vmem:[#allocation5 + $0x248] sm:$0xff]
        %v397 = vld [vmem:[#allocation5 + $0x250] sm:$0xff]
        %v398 = vld [vmem:[#allocation5 + $0x258] sm:$0xff]
        %v399 = vld [vmem:[#allocation5 + $0x260] sm:$0xff]
        %v400 = vld [vmem:[#allocation5 + $0x268] sm:$0xff]
        %v401 = vld [vmem:[#allocation5 + $0x270] sm:$0xff]
        %v402 = vld [vmem:[#allocation5 + $0x278] sm:$0xff]
        %v403 = vld [vmem:[#allocation5 + $0x280] sm:$0xff]
        %v404 = vld [vmem:[#allocation5 + $0x288] sm:$0xff]
        %v405 = vld [vmem:[#allocation5 + $0x290] sm:$0xff]
        %v406 = vld [vmem:[#allocation5 + $0x298] sm:$0xff]
        %v407 = vld [vmem:[#allocation5 + $0x2a0] sm:$0xff]
        %v408 = vld [vmem:[#allocation5 + $0x2a8] sm:$0xff]
        %v409 = vld [vmem:[#allocation5 + $0x2b0] sm:$0xff]
        %v410 = vld [vmem:[#allocation5 + $0x2b8] sm:$0xff]
        %v411 = vld [vmem:[#allocation5 + $0x2c0] sm:$0xff]
        %v412 = vld [vmem:[#allocation5 + $0x2c8] sm:$0xff]
        %v413 = vld [vmem:[#allocation5 + $0x2d0] sm:$0xff]
        %v414 = vld [vmem:[#allocation5 + $0x2d8] sm:$0xff]
        %v415 = vld [vmem:[#allocation5 + $0x2e0] sm:$0xff]
        %v416 = vld [vmem:[#allocation5 + $0x2e8] sm:$0xff]
        %v417 = vld [vmem:[#allocation5 + $0x2f0] sm:$0xff]
        %v418 = vld [vmem:[#allocation5 + $0x2f8] sm:$0xff]
        %v419 = vld [vmem:[%s2] sm:$0x3]
        %v421 = vlaneseq
        %v422 = vshrl.u32 %v421, 7
        %v423 = vsub.s32 0, %v422
        %v424 = vrot.slane %v419, %v423
        %v425 = vlaneseq
        %v426 = vshrl.u32 %v425, 7
        %v427 = vsub.s32 1, %v426
        %v428 = vrot.slane %v419, %v427
        %v479 = vunpack.c.l.b16 %v275
        %v480 = vunpack.c.h.b16 %v275
        %v481 = vunpack.c.l.b16 %v276
        %v482 = vunpack.c.h.b16 %v276
        %v483 = vunpack.c.l.b16 %v277
        %v484 = vunpack.c.h.b16 %v277
        %v485 = vunpack.c.l.b16 %v278
        %v486 = vunpack.c.h.b16 %v278
        %v487 = vunpack.c.l.b16 %v279
        %v488 = vunpack.c.h.b16 %v279
        %v489 = vunpack.c.l.b16 %v280
        %v490 = vunpack.c.h.b16 %v280
        %v491 = vunpack.c.l.b16 %v281
        %v492 = vunpack.c.h.b16 %v281
        %v493 = vunpack.c.l.b16 %v282
        %v494 = vunpack.c.h.b16 %v282
        %v495 = vunpack.c.l.b16 %v283
        %v496 = vunpack.c.h.b16 %v283
        %v497 = vunpack.c.l.b16 %v284
        %v498 = vunpack.c.h.b16 %v284
        %v499 = vunpack.c.l.b16 %v285
        %v500 = vunpack.c.h.b16 %v285
        %v501 = vunpack.c.l.b16 %v286
        %v502 = vunpack.c.h.b16 %v286
        %v503 = vunpack.c.l.b16 %v287
        %v504 = vunpack.c.h.b16 %v287
        %v505 = vunpack.c.l.b16 %v288
        %v506 = vunpack.c.h.b16 %v288
        %v507 = vunpack.c.l.b16 %v289
        %v508 = vunpack.c.h.b16 %v289
        %v509 = vunpack.c.l.b16 %v290
        %v510 = vunpack.c.h.b16 %v290
        %v511 = vunpack.c.l.b16 %v291
        %v512 = vunpack.c.h.b16 %v291
        %v513 = vunpack.c.l.b16 %v292
        %v514 = vunpack.c.h.b16 %v292
        %v515 = vunpack.c.l.b16 %v293
        %v516 = vunpack.c.h.b16 %v293
        %v517 = vunpack.c.l.b16 %v294
        %v518 = vunpack.c.h.b16 %v294
        %v519 = vunpack.c.l.b16 %v295
        %v520 = vunpack.c.h.b16 %v295
        %v521 = vunpack.c.l.b16 %v296
        %v522 = vunpack.c.h.b16 %v296
        %v523 = vunpack.c.l.b16 %v297
        %v524 = vunpack.c.h.b16 %v297
        %v525 = vunpack.c.l.b16 %v298
        %v526 = vunpack.c.h.b16 %v298
        %v527 = vunpack.c.l.b16 %v299
        %v528 = vunpack.c.h.b16 %v299
        %v529 = vunpack.c.l.b16 %v300
        %v530 = vunpack.c.h.b16 %v300
        %v531 = vunpack.c.l.b16 %v301
        %v532 = vunpack.c.h.b16 %v301
        %v533 = vunpack.c.l.b16 %v302
        %v534 = vunpack.c.h.b16 %v302
        %v535 = vunpack.c.l.b16 %v303
        %v536 = vunpack.c.h.b16 %v303
        %v537 = vunpack.c.l.b16 %v304
        %v538 = vunpack.c.h.b16 %v304
        %v539 = vunpack.c.l.b16 %v305
        %v540 = vunpack.c.h.b16 %v305
        %v541 = vunpack.c.l.b16 %v306
        %v542 = vunpack.c.h.b16 %v306
        %v543 = vunpack.c.l.b16 %v307
        %v544 = vunpack.c.h.b16 %v307
        %v545 = vunpack.c.l.b16 %v308
        %v546 = vunpack.c.h.b16 %v308
        %v547 = vunpack.c.l.b16 %v309
        %v548 = vunpack.c.h.b16 %v309
        %v549 = vunpack.c.l.b16 %v310
        %v550 = vunpack.c.h.b16 %v310
        %v551 = vunpack.c.l.b16 %v311
        %v552 = vunpack.c.h.b16 %v311
        %v553 = vunpack.c.l.b16 %v312
        %v554 = vunpack.c.h.b16 %v312
        %v555 = vunpack.c.l.b16 %v313
        %v556 = vunpack.c.h.b16 %v313
        %v557 = vunpack.c.l.b16 %v314
        %v558 = vunpack.c.h.b16 %v314
        %v559 = vunpack.c.l.b16 %v315
        %v560 = vunpack.c.h.b16 %v315
        %v561 = vunpack.c.l.b16 %v316
        %v562 = vunpack.c.h.b16 %v316
        %v563 = vunpack.c.l.b16 %v317
        %v564 = vunpack.c.h.b16 %v317
        %v565 = vunpack.c.l.b16 %v318
        %v566 = vunpack.c.h.b16 %v318
        %v567 = vunpack.c.l.b16 %v319
        %v568 = vunpack.c.h.b16 %v319
        %v569 = vunpack.c.l.b16 %v320
        %v570 = vunpack.c.h.b16 %v320
        %v571 = vunpack.c.l.b16 %v321
        %v572 = vunpack.c.h.b16 %v321
        %v573 = vunpack.c.l.b16 %v322
        %v574 = vunpack.c.h.b16 %v322
        %v575 = vpack.c.b16 %v485, %v479
        %v576 = vpack.c.b16 %v486, %v480
        %v577 = vpack.c.b16 %v487, %v481
        %v578 = vpack.c.b16 %v488, %v482
        %v579 = vpack.c.b16 %v489, %v483
        %v580 = vpack.c.b16 %v490, %v484
        %v581 = vpack.c.b16 %v497, %v491
        %v582 = vpack.c.b16 %v498, %v492
        %v583 = vpack.c.b16 %v499, %v493
        %v584 = vpack.c.b16 %v500, %v494
        %v585 = vpack.c.b16 %v501, %v495
        %v586 = vpack.c.b16 %v502, %v496
        %v587 = vpack.c.b16 %v509, %v503
        %v588 = vpack.c.b16 %v510, %v504
        %v589 = vpack.c.b16 %v511, %v505
        %v590 = vpack.c.b16 %v512, %v506
        %v591 = vpack.c.b16 %v513, %v507
        %v592 = vpack.c.b16 %v514, %v508
        %v593 = vpack.c.b16 %v521, %v515
        %v594 = vpack.c.b16 %v522, %v516
        %v595 = vpack.c.b16 %v523, %v517
        %v596 = vpack.c.b16 %v524, %v518
        %v597 = vpack.c.b16 %v525, %v519
        %v598 = vpack.c.b16 %v526, %v520
        %v599 = vpack.c.b16 %v533, %v527
        %v600 = vpack.c.b16 %v534, %v528
        %v601 = vpack.c.b16 %v535, %v529
        %v602 = vpack.c.b16 %v536, %v530
        %v603 = vpack.c.b16 %v537, %v531
        %v604 = vpack.c.b16 %v538, %v532
        %v605 = vpack.c.b16 %v545, %v539
        %v606 = vpack.c.b16 %v546, %v540
        %v607 = vpack.c.b16 %v547, %v541
        %v608 = vpack.c.b16 %v548, %v542
        %v609 = vpack.c.b16 %v549, %v543
        %v610 = vpack.c.b16 %v550, %v544
        %v611 = vpack.c.b16 %v557, %v551
        %v612 = vpack.c.b16 %v558, %v552
        %v613 = vpack.c.b16 %v559, %v553
        %v614 = vpack.c.b16 %v560, %v554
        %v615 = vpack.c.b16 %v561, %v555
        %v616 = vpack.c.b16 %v562, %v556
        %v617 = vpack.c.b16 %v569, %v563
        %v618 = vpack.c.b16 %v570, %v564
        %v619 = vpack.c.b16 %v571, %v565
        %v620 = vpack.c.b16 %v572, %v566
        %v621 = vpack.c.b16 %v573, %v567
        %v622 = vpack.c.b16 %v574, %v568
        %v767 = vunpack.c.l.b16 %v323
        %v768 = vunpack.c.h.b16 %v323
        %v769 = vunpack.c.l.b16 %v324
        %v770 = vunpack.c.h.b16 %v324
        %v771 = vunpack.c.l.b16 %v325
        %v772 = vunpack.c.h.b16 %v325
        %v773 = vunpack.c.l.b16 %v326
        %v774 = vunpack.c.h.b16 %v326
        %v775 = vunpack.c.l.b16 %v327
        %v776 = vunpack.c.h.b16 %v327
        %v777 = vunpack.c.l.b16 %v328
        %v778 = vunpack.c.h.b16 %v328
        %v779 = vunpack.c.l.b16 %v329
        %v780 = vunpack.c.h.b16 %v329
        %v781 = vunpack.c.l.b16 %v330
        %v782 = vunpack.c.h.b16 %v330
        %v783 = vunpack.c.l.b16 %v331
        %v784 = vunpack.c.h.b16 %v331
        %v785 = vunpack.c.l.b16 %v332
        %v786 = vunpack.c.h.b16 %v332
        %v787 = vunpack.c.l.b16 %v333
        %v788 = vunpack.c.h.b16 %v333
        %v789 = vunpack.c.l.b16 %v334
        %v790 = vunpack.c.h.b16 %v334
        %v791 = vunpack.c.l.b16 %v335
        %v792 = vunpack.c.h.b16 %v335
        %v793 = vunpack.c.l.b16 %v336
        %v794 = vunpack.c.h.b16 %v336
        %v795 = vunpack.c.l.b16 %v337
        %v796 = vunpack.c.h.b16 %v337
        %v797 = vunpack.c.l.b16 %v338
        %v798 = vunpack.c.h.b16 %v338
        %v799 = vunpack.c.l.b16 %v339
        %v800 = vunpack.c.h.b16 %v339
        %v801 = vunpack.c.l.b16 %v340
        %v802 = vunpack.c.h.b16 %v340
        %v803 = vunpack.c.l.b16 %v341
        %v804 = vunpack.c.h.b16 %v341
        %v805 = vunpack.c.l.b16 %v342
        %v806 = vunpack.c.h.b16 %v342
        %v807 = vunpack.c.l.b16 %v343
        %v808 = vunpack.c.h.b16 %v343
        %v809 = vunpack.c.l.b16 %v344
        %v810 = vunpack.c.h.b16 %v344
        %v811 = vunpack.c.l.b16 %v345
        %v812 = vunpack.c.h.b16 %v345
        %v813 = vunpack.c.l.b16 %v346
        %v814 = vunpack.c.h.b16 %v346
        %v815 = vunpack.c.l.b16 %v347
        %v816 = vunpack.c.h.b16 %v347
        %v817 = vunpack.c.l.b16 %v348
        %v818 = vunpack.c.h.b16 %v348
        %v819 = vunpack.c.l.b16 %v349
        %v820 = vunpack.c.h.b16 %v349
        %v821 = vunpack.c.l.b16 %v350
        %v822 = vunpack.c.h.b16 %v350
        %v823 = vunpack.c.l.b16 %v351
        %v824 = vunpack.c.h.b16 %v351
        %v825 = vunpack.c.l.b16 %v352
        %v826 = vunpack.c.h.b16 %v352
        %v827 = vunpack.c.l.b16 %v353
        %v828 = vunpack.c.h.b16 %v353
        %v829 = vunpack.c.l.b16 %v354
        %v830 = vunpack.c.h.b16 %v354
        %v831 = vunpack.c.l.b16 %v355
        %v832 = vunpack.c.h.b16 %v355
        %v833 = vunpack.c.l.b16 %v356
        %v834 = vunpack.c.h.b16 %v356
        %v835 = vunpack.c.l.b16 %v357
        %v836 = vunpack.c.h.b16 %v357
        %v837 = vunpack.c.l.b16 %v358
        %v838 = vunpack.c.h.b16 %v358
        %v839 = vunpack.c.l.b16 %v359
        %v840 = vunpack.c.h.b16 %v359
        %v841 = vunpack.c.l.b16 %v360
        %v842 = vunpack.c.h.b16 %v360
        %v843 = vunpack.c.l.b16 %v361
        %v844 = vunpack.c.h.b16 %v361
        %v845 = vunpack.c.l.b16 %v362
        %v846 = vunpack.c.h.b16 %v362
        %v847 = vunpack.c.l.b16 %v363
        %v848 = vunpack.c.h.b16 %v363
        %v849 = vunpack.c.l.b16 %v364
        %v850 = vunpack.c.h.b16 %v364
        %v851 = vunpack.c.l.b16 %v365
        %v852 = vunpack.c.h.b16 %v365
        %v853 = vunpack.c.l.b16 %v366
        %v854 = vunpack.c.h.b16 %v366
        %v855 = vunpack.c.l.b16 %v367
        %v856 = vunpack.c.h.b16 %v367
        %v857 = vunpack.c.l.b16 %v368
        %v858 = vunpack.c.h.b16 %v368
        %v859 = vunpack.c.l.b16 %v369
        %v860 = vunpack.c.h.b16 %v369
        %v861 = vunpack.c.l.b16 %v370
        %v862 = vunpack.c.h.b16 %v370
        %v863 = vunpack.c.l.b16 %v371
        %v864 = vunpack.c.h.b16 %v371
        %v865 = vunpack.c.l.b16 %v372
        %v866 = vunpack.c.h.b16 %v372
        %v867 = vunpack.c.l.b16 %v373
        %v868 = vunpack.c.h.b16 %v373
        %v869 = vunpack.c.l.b16 %v374
        %v870 = vunpack.c.h.b16 %v374
        %v871 = vunpack.c.l.b16 %v375
        %v872 = vunpack.c.h.b16 %v375
        %v873 = vunpack.c.l.b16 %v376
        %v874 = vunpack.c.h.b16 %v376
        %v875 = vunpack.c.l.b16 %v377
        %v876 = vunpack.c.h.b16 %v377
        %v877 = vunpack.c.l.b16 %v378
        %v878 = vunpack.c.h.b16 %v378
        %v879 = vunpack.c.l.b16 %v379
        %v880 = vunpack.c.h.b16 %v379
        %v881 = vunpack.c.l.b16 %v380
        %v882 = vunpack.c.h.b16 %v380
        %v883 = vunpack.c.l.b16 %v381
        %v884 = vunpack.c.h.b16 %v381
        %v885 = vunpack.c.l.b16 %v382
        %v886 = vunpack.c.h.b16 %v382
        %v887 = vunpack.c.l.b16 %v383
        %v888 = vunpack.c.h.b16 %v383
        %v889 = vunpack.c.l.b16 %v384
        %v890 = vunpack.c.h.b16 %v384
        %v891 = vunpack.c.l.b16 %v385
        %v892 = vunpack.c.h.b16 %v385
        %v893 = vunpack.c.l.b16 %v386
        %v894 = vunpack.c.h.b16 %v386
        %v895 = vunpack.c.l.b16 %v387
        %v896 = vunpack.c.h.b16 %v387
        %v897 = vunpack.c.l.b16 %v388
        %v898 = vunpack.c.h.b16 %v388
        %v899 = vunpack.c.l.b16 %v389
        %v900 = vunpack.c.h.b16 %v389
        %v901 = vunpack.c.l.b16 %v390
        %v902 = vunpack.c.h.b16 %v390
        %v903 = vunpack.c.l.b16 %v391
        %v904 = vunpack.c.h.b16 %v391
        %v905 = vunpack.c.l.b16 %v392
        %v906 = vunpack.c.h.b16 %v392
        %v907 = vunpack.c.l.b16 %v393
        %v908 = vunpack.c.h.b16 %v393
        %v909 = vunpack.c.l.b16 %v394
        %v910 = vunpack.c.h.b16 %v394
        %v911 = vunpack.c.l.b16 %v395
        %v912 = vunpack.c.h.b16 %v395
        %v913 = vunpack.c.l.b16 %v396
        %v914 = vunpack.c.h.b16 %v396
        %v915 = vunpack.c.l.b16 %v397
        %v916 = vunpack.c.h.b16 %v397
        %v917 = vunpack.c.l.b16 %v398
        %v918 = vunpack.c.h.b16 %v398
        %v919 = vunpack.c.l.b16 %v399
        %v920 = vunpack.c.h.b16 %v399
        %v921 = vunpack.c.l.b16 %v400
        %v922 = vunpack.c.h.b16 %v400
        %v923 = vunpack.c.l.b16 %v401
        %v924 = vunpack.c.h.b16 %v401
        %v925 = vunpack.c.l.b16 %v402
        %v926 = vunpack.c.h.b16 %v402
        %v927 = vunpack.c.l.b16 %v403
        %v928 = vunpack.c.h.b16 %v403
        %v929 = vunpack.c.l.b16 %v404
        %v930 = vunpack.c.h.b16 %v404
        %v931 = vunpack.c.l.b16 %v405
        %v932 = vunpack.c.h.b16 %v405
        %v933 = vunpack.c.l.b16 %v406
        %v934 = vunpack.c.h.b16 %v406
        %v935 = vunpack.c.l.b16 %v407
        %v936 = vunpack.c.h.b16 %v407
        %v937 = vunpack.c.l.b16 %v408
        %v938 = vunpack.c.h.b16 %v408
        %v939 = vunpack.c.l.b16 %v409
        %v940 = vunpack.c.h.b16 %v409
        %v941 = vunpack.c.l.b16 %v410
        %v942 = vunpack.c.h.b16 %v410
        %v943 = vunpack.c.l.b16 %v411
        %v944 = vunpack.c.h.b16 %v411
        %v945 = vunpack.c.l.b16 %v412
        %v946 = vunpack.c.h.b16 %v412
        %v947 = vunpack.c.l.b16 %v413
        %v948 = vunpack.c.h.b16 %v413
        %v949 = vunpack.c.l.b16 %v414
        %v950 = vunpack.c.h.b16 %v414
        %v951 = vunpack.c.l.b16 %v415
        %v952 = vunpack.c.h.b16 %v415
        %v953 = vunpack.c.l.b16 %v416
        %v954 = vunpack.c.h.b16 %v416
        %v955 = vunpack.c.l.b16 %v417
        %v956 = vunpack.c.h.b16 %v417
        %v957 = vunpack.c.l.b16 %v418
        %v958 = vunpack.c.h.b16 %v418
        %v959 = vpack.c.b16 %v769, %v767
        %v960 = vpack.c.b16 %v770, %v768
        %v961 = vpack.c.b16 %v773, %v771
        %v962 = vpack.c.b16 %v774, %v772
        %v963 = vpack.c.b16 %v777, %v775
        %v964 = vpack.c.b16 %v778, %v776
        %v965 = vpack.c.b16 %v781, %v779
        %v966 = vpack.c.b16 %v782, %v780
        %v967 = vpack.c.b16 %v785, %v783
        %v968 = vpack.c.b16 %v786, %v784
        %v969 = vpack.c.b16 %v789, %v787
        %v970 = vpack.c.b16 %v790, %v788
        %v971 = vpack.c.b16 %v793, %v791
        %v972 = vpack.c.b16 %v794, %v792
        %v973 = vpack.c.b16 %v797, %v795
        %v974 = vpack.c.b16 %v798, %v796
        %v975 = vpack.c.b16 %v801, %v799
        %v976 = vpack.c.b16 %v802, %v800
        %v977 = vpack.c.b16 %v805, %v803
        %v978 = vpack.c.b16 %v806, %v804
        %v979 = vpack.c.b16 %v809, %v807
        %v980 = vpack.c.b16 %v810, %v808
        %v981 = vpack.c.b16 %v813, %v811
        %v982 = vpack.c.b16 %v814, %v812
        %v983 = vpack.c.b16 %v817, %v815
        %v984 = vpack.c.b16 %v818, %v816
        %v985 = vpack.c.b16 %v821, %v819
        %v986 = vpack.c.b16 %v822, %v820
        %v987 = vpack.c.b16 %v825, %v823
        %v988 = vpack.c.b16 %v826, %v824
        %v989 = vpack.c.b16 %v829, %v827
        %v990 = vpack.c.b16 %v830, %v828
        %v991 = vpack.c.b16 %v833, %v831
        %v992 = vpack.c.b16 %v834, %v832
        %v993 = vpack.c.b16 %v837, %v835
        %v994 = vpack.c.b16 %v838, %v836
        %v995 = vpack.c.b16 %v841, %v839
        %v996 = vpack.c.b16 %v842, %v840
        %v997 = vpack.c.b16 %v845, %v843
        %v998 = vpack.c.b16 %v846, %v844
        %v999 = vpack.c.b16 %v849, %v847
        %v1000 = vpack.c.b16 %v850, %v848
        %v1001 = vpack.c.b16 %v853, %v851
        %v1002 = vpack.c.b16 %v854, %v852
        %v1003 = vpack.c.b16 %v857, %v855
        %v1004 = vpack.c.b16 %v858, %v856
        %v1005 = vpack.c.b16 %v861, %v859
        %v1006 = vpack.c.b16 %v862, %v860
        %v1007 = vpack.c.b16 %v865, %v863
        %v1008 = vpack.c.b16 %v866, %v864
        %v1009 = vpack.c.b16 %v869, %v867
        %v1010 = vpack.c.b16 %v870, %v868
        %v1011 = vpack.c.b16 %v873, %v871
        %v1012 = vpack.c.b16 %v874, %v872
        %v1013 = vpack.c.b16 %v877, %v875
        %v1014 = vpack.c.b16 %v878, %v876
        %v1015 = vpack.c.b16 %v881, %v879
        %v1016 = vpack.c.b16 %v882, %v880
        %v1017 = vpack.c.b16 %v885, %v883
        %v1018 = vpack.c.b16 %v886, %v884
        %v1019 = vpack.c.b16 %v889, %v887
        %v1020 = vpack.c.b16 %v890, %v888
        %v1021 = vpack.c.b16 %v893, %v891
        %v1022 = vpack.c.b16 %v894, %v892
        %v1023 = vpack.c.b16 %v897, %v895
        %v1024 = vpack.c.b16 %v898, %v896
        %v1025 = vpack.c.b16 %v901, %v899
        %v1026 = vpack.c.b16 %v902, %v900
        %v1027 = vpack.c.b16 %v905, %v903
        %v1028 = vpack.c.b16 %v906, %v904
        %v1029 = vpack.c.b16 %v909, %v907
        %v1030 = vpack.c.b16 %v910, %v908
        %v1031 = vpack.c.b16 %v913, %v911
        %v1032 = vpack.c.b16 %v914, %v912
        %v1033 = vpack.c.b16 %v917, %v915
        %v1034 = vpack.c.b16 %v918, %v916
        %v1035 = vpack.c.b16 %v921, %v919
        %v1036 = vpack.c.b16 %v922, %v920
        %v1037 = vpack.c.b16 %v925, %v923
        %v1038 = vpack.c.b16 %v926, %v924
        %v1039 = vpack.c.b16 %v929, %v927
        %v1040 = vpack.c.b16 %v930, %v928
        %v1041 = vpack.c.b16 %v933, %v931
        %v1042 = vpack.c.b16 %v934, %v932
        %v1043 = vpack.c.b16 %v937, %v935
        %v1044 = vpack.c.b16 %v938, %v936
        %v1045 = vpack.c.b16 %v941, %v939
        %v1046 = vpack.c.b16 %v942, %v940
        %v1047 = vpack.c.b16 %v945, %v943
        %v1048 = vpack.c.b16 %v946, %v944
        %v1049 = vpack.c.b16 %v949, %v947
        %v1050 = vpack.c.b16 %v950, %v948
        %v1051 = vpack.c.b16 %v953, %v951
        %v1052 = vpack.c.b16 %v954, %v952
        %v1053 = vpack.c.b16 %v957, %v955
        %v1054 = vpack.c.b16 %v958, %v956
        %1151 = vmatprep.subr.bf16.mxu0 %v960
        %1152 = vmatpush1.bf16.msra.mxu0 %v959
        %1153 = vmatprep.subr.bf16.mxu0 %v962
        %1154 = vmatpush1.bf16.msra.mxu0 %v961
        %1155 = vmatprep.subr.bf16.mxu0 %v964
        %1156 = vmatpush1.bf16.msra.mxu0 %v963
        %1157 = vmatprep.subr.bf16.mxu0 %v966
        %1158 = vmatpush1.bf16.msra.mxu0 %v965
        %1159 = vmatprep.subr.bf16.mxu0 %v968
        %1160 = vmatpush1.bf16.msra.mxu0 %v967
        %1161 = vmatprep.subr.bf16.mxu0 %v970
        %1162 = vmatpush1.bf16.msra.mxu0 %v969
        %1163 = vmatprep.subr.bf16.mxu0 %v972
        %1164 = vmatpush1.bf16.msra.mxu0 %v971
        %1165 = vmatprep.subr.bf16.mxu0 %v974
        %1166 = vmatpush1.bf16.msra.mxu0 %v973
        %1167 = vmatprep.subr.bf16.mxu0 %v976
        %1168 = vmatpush1.bf16.msra.mxu0 %v975
        %1169 = vmatprep.subr.bf16.mxu0 %v978
        %1170 = vmatpush1.bf16.msra.mxu0 %v977
        %1171 = vmatprep.subr.bf16.mxu0 %v980
        %1172 = vmatpush1.bf16.msra.mxu0 %v979
        %1173 = vmatprep.subr.bf16.mxu0 %v982
        %1174 = vmatpush1.bf16.msra.mxu0 %v981
        %1175 = vmatprep.subr.bf16.mxu0 %v984
        %1176 = vmatpush1.bf16.msra.mxu0 %v983
        %1177 = vmatprep.subr.bf16.mxu0 %v986
        %1178 = vmatpush1.bf16.msra.mxu0 %v985
        %1179 = vmatprep.subr.bf16.mxu0 %v988
        %1180 = vmatpush1.bf16.msra.mxu0 %v987
        %1181 = vmatprep.subr.bf16.mxu0 %v990
        %1182 = vmatpush1.bf16.msra.mxu0 %v989
        %1183 = vmatprep.mubr.bf16.mxu0 %v576
        %1184 = vmatmul.mubr.bf16.gmra.mrb[0].mxu0 %v575
        %v1185 = vpop.f32.mrb[0].mxu0
        %v1186 = vadd.f32 %v424, %v1185
        %v1187 = vpop.f32.mrb[0].mxu0
        %v1188 = vadd.f32 %v428, %v1187
        %v1189 = vpop.f32.mrb[0].mxu0
        %v1190 = vadd.f32 %v424, %v1189
        %v1191 = vpop.f32.mrb[0].mxu0
        %v1192 = vadd.f32 %v428, %v1191
        %1193 = vmatprep.mubr.bf16.mxu0 %v582
        %1194 = vmatmul.mubr.bf16.gmra.mrb[0].mxu0 %v581
        %v1195 = vpop.f32.mrb[0].mxu0
        %v1196 = vadd.f32 %v424, %v1195
        %v1197 = vpop.f32.mrb[0].mxu0
        %v1198 = vadd.f32 %v428, %v1197
        %v1199 = vpop.f32.mrb[0].mxu0
        %v1200 = vadd.f32 %v424, %v1199
        %v1201 = vpop.f32.mrb[0].mxu0
        %v1202 = vadd.f32 %v428, %v1201
        %1203 = vmatprep.mubr.bf16.mxu0 %v588
        %1204 = vmatmul.mubr.bf16.gmra.mrb[0].mxu0 %v587
        %v1205 = vpop.f32.mrb[0].mxu0
        %v1206 = vadd.f32 %v424, %v1205
        %v1207 = vpop.f32.mrb[0].mxu0
        %v1208 = vadd.f32 %v428, %v1207
        %v1209 = vpop.f32.mrb[0].mxu0
        %v1210 = vadd.f32 %v424, %v1209
        %v1211 = vpop.f32.mrb[0].mxu0
        %v1212 = vadd.f32 %v428, %v1211
        %1213 = vmatprep.mubr.bf16.mxu0 %v594
        %1214 = vmatmul.mubr.bf16.gmra.mrb[0].mxu0 %v593
        %v1215 = vpop.f32.mrb[0].mxu0
        %v1216 = vadd.f32 %v424, %v1215
        %v1217 = vpop.f32.mrb[0].mxu0
        %v1218 = vadd.f32 %v428, %v1217
        %v1219 = vpop.f32.mrb[0].mxu0
        %v1220 = vadd.f32 %v424, %v1219
        %v1221 = vpop.f32.mrb[0].mxu0
        %v1222 = vadd.f32 %v428, %v1221
        %1223 = vmatprep.mubr.bf16.mxu0 %v600
        %1224 = vmatmul.mubr.bf16.gmra.mrb[0].mxu0 %v599
        %v1225 = vpop.f32.mrb[0].mxu0
        %v1226 = vadd.f32 %v424, %v1225
        %v1227 = vpop.f32.mrb[0].mxu0
        %v1228 = vadd.f32 %v428, %v1227
        %v1229 = vpop.f32.mrb[0].mxu0
        %v1230 = vadd.f32 %v424, %v1229
        %v1231 = vpop.f32.mrb[0].mxu0
        %v1232 = vadd.f32 %v428, %v1231
        %1233 = vmatprep.mubr.bf16.mxu0 %v606
        %1234 = vmatmul.mubr.bf16.gmra.mrb[0].mxu0 %v605
        %v1235 = vpop.f32.mrb[0].mxu0
        %v1236 = vadd.f32 %v424, %v1235
        %v1237 = vpop.f32.mrb[0].mxu0
        %v1238 = vadd.f32 %v428, %v1237
        %v1239 = vpop.f32.mrb[0].mxu0
        %v1240 = vadd.f32 %v424, %v1239
        %v1241 = vpop.f32.mrb[0].mxu0
        %v1242 = vadd.f32 %v428, %v1241
        %1243 = vmatprep.mubr.bf16.mxu0 %v612
        %1244 = vmatmul.mubr.bf16.gmra.mrb[0].mxu0 %v611
        %v1245 = vpop.f32.mrb[0].mxu0
        %v1246 = vadd.f32 %v424, %v1245
        %v1247 = vpop.f32.mrb[0].mxu0
        %v1248 = vadd.f32 %v428, %v1247
        %v1249 = vpop.f32.mrb[0].mxu0
        %v1250 = vadd.f32 %v424, %v1249
        %v1251 = vpop.f32.mrb[0].mxu0
        %v1252 = vadd.f32 %v428, %v1251
        %1253 = vmatprep.mubr.bf16.mxu0 %v618
        %1254 = vmatmul.mubr.bf16.gmra.mrb[0].mxu0 %v617
        %v1255 = vpop.f32.mrb[0].mxu0
        %v1256 = vadd.f32 %v424, %v1255
        %v1257 = vpop.f32.mrb[0].mxu0
        %v1258 = vadd.f32 %v428, %v1257
        %v1259 = vpop.f32.mrb[0].mxu0
        %v1260 = vadd.f32 %v424, %v1259
        %v1261 = vpop.f32.mrb[0].mxu0
        %v1262 = vadd.f32 %v428, %v1261
        %1263 = vdwg.mxu0
        %1264 = vmatprep.subr.bf16.mxu0 %v992
        %1265 = vmatpush1.bf16.msra.mxu0 %v991
        %1266 = vmatprep.subr.bf16.mxu0 %v994
        %1267 = vmatpush1.bf16.msra.mxu0 %v993
        %1268 = vmatprep.subr.bf16.mxu0 %v996
        %1269 = vmatpush1.bf16.msra.mxu0 %v995
        %1270 = vmatprep.subr.bf16.mxu0 %v998
        %1271 = vmatpush1.bf16.msra.mxu0 %v997
        %1272 = vmatprep.subr.bf16.mxu0 %v1000
        %1273 = vmatpush1.bf16.msra.mxu0 %v999
        %1274 = vmatprep.subr.bf16.mxu0 %v1002
        %1275 = vmatpush1.bf16.msra.mxu0 %v1001
        %1276 = vmatprep.subr.bf16.mxu0 %v1004
        %1277 = vmatpush1.bf16.msra.mxu0 %v1003
        %1278 = vmatprep.subr.bf16.mxu0 %v1006
        %1279 = vmatpush1.bf16.msra.mxu0 %v1005
        %1280 = vmatprep.subr.bf16.mxu0 %v1008
        %1281 = vmatpush1.bf16.msra.mxu0 %v1007
        %1282 = vmatprep.subr.bf16.mxu0 %v1010
        %1283 = vmatpush1.bf16.msra.mxu0 %v1009
        %1284 = vmatprep.subr.bf16.mxu0 %v1012
        %1285 = vmatpush1.bf16.msra.mxu0 %v1011
        %1286 = vmatprep.subr.bf16.mxu0 %v1014
        %1287 = vmatpush1.bf16.msra.mxu0 %v1013
        %1288 = vmatprep.subr.bf16.mxu0 %v1016
        %1289 = vmatpush1.bf16.msra.mxu0 %v1015
        %1290 = vmatprep.subr.bf16.mxu0 %v1018
        %1291 = vmatpush1.bf16.msra.mxu0 %v1017
        %1292 = vmatprep.subr.bf16.mxu0 %v1020
        %1293 = vmatpush1.bf16.msra.mxu0 %v1019
        %1294 = vmatprep.subr.bf16.mxu0 %v1022
        %1295 = vmatpush1.bf16.msra.mxu0 %v1021
        %1296 = vmatprep.mubr.bf16.mxu0 %v578
        %1297 = vmatmul.mubr.bf16.gmra.mrb[0].mxu0 %v577
        %v1298 = vpop.f32.mrb[0].mxu0
        %v1299 = vadd.f32 %v1186, %v1298
        %v1300 = vpop.f32.mrb[0].mxu0
        %v1301 = vadd.f32 %v1188, %v1300
        %v1302 = vpop.f32.mrb[0].mxu0
        %v1303 = vadd.f32 %v1190, %v1302
        %v1304 = vpop.f32.mrb[0].mxu0
        %v1305 = vadd.f32 %v1192, %v1304
        %1306 = vmatprep.mubr.bf16.mxu0 %v584
        %1307 = vmatmul.mubr.bf16.gmra.mrb[0].mxu0 %v583
        %v1308 = vpop.f32.mrb[0].mxu0
        %v1309 = vadd.f32 %v1196, %v1308
        %v1310 = vpop.f32.mrb[0].mxu0
        %v1311 = vadd.f32 %v1198, %v1310
        %v1312 = vpop.f32.mrb[0].mxu0
        %v1313 = vadd.f32 %v1200, %v1312
        %v1314 = vpop.f32.mrb[0].mxu0
        %v1315 = vadd.f32 %v1202, %v1314
        %1316 = vmatprep.mubr.bf16.mxu0 %v590
        %1317 = vmatmul.mubr.bf16.gmra.mrb[0].mxu0 %v589
        %v1318 = vpop.f32.mrb[0].mxu0
        %v1319 = vadd.f32 %v1206, %v1318
        %v1320 = vpop.f32.mrb[0].mxu0
        %v1321 = vadd.f32 %v1208, %v1320
        %v1322 = vpop.f32.mrb[0].mxu0
        %v1323 = vadd.f32 %v1210, %v1322
        %v1324 = vpop.f32.mrb[0].mxu0
        %v1325 = vadd.f32 %v1212, %v1324
        %1326 = vmatprep.mubr.bf16.mxu0 %v596
        %1327 = vmatmul.mubr.bf16.gmra.mrb[0].mxu0 %v595
        %v1328 = vpop.f32.mrb[0].mxu0
        %v1329 = vadd.f32 %v1216, %v1328
        %v1330 = vpop.f32.mrb[0].mxu0
        %v1331 = vadd.f32 %v1218, %v1330
        %v1332 = vpop.f32.mrb[0].mxu0
        %v1333 = vadd.f32 %v1220, %v1332
        %v1334 = vpop.f32.mrb[0].mxu0
        %v1335 = vadd.f32 %v1222, %v1334
        %1336 = vmatprep.mubr.bf16.mxu0 %v602
        %1337 = vmatmul.mubr.bf16.gmra.mrb[0].mxu0 %v601
        %v1338 = vpop.f32.mrb[0].mxu0
        %v1339 = vadd.f32 %v1226, %v1338
        %v1340 = vpop.f32.mrb[0].mxu0
        %v1341 = vadd.f32 %v1228, %v1340
        %v1342 = vpop.f32.mrb[0].mxu0
        %v1343 = vadd.f32 %v1230, %v1342
        %v1344 = vpop.f32.mrb[0].mxu0
        %v1345 = vadd.f32 %v1232, %v1344
        %1346 = vmatprep.mubr.bf16.mxu0 %v608
        %1347 = vmatmul.mubr.bf16.gmra.mrb[0].mxu0 %v607
        %v1348 = vpop.f32.mrb[0].mxu0
        %v1349 = vadd.f32 %v1236, %v1348
        %v1350 = vpop.f32.mrb[0].mxu0
        %v1351 = vadd.f32 %v1238, %v1350
        %v1352 = vpop.f32.mrb[0].mxu0
        %v1353 = vadd.f32 %v1240, %v1352
        %v1354 = vpop.f32.mrb[0].mxu0
        %v1355 = vadd.f32 %v1242, %v1354
        %1356 = vmatprep.mubr.bf16.mxu0 %v614
        %1357 = vmatmul.mubr.bf16.gmra.mrb[0].mxu0 %v613
        %v1358 = vpop.f32.mrb[0].mxu0
        %v1359 = vadd.f32 %v1246, %v1358
        %v1360 = vpop.f32.mrb[0].mxu0
        %v1361 = vadd.f32 %v1248, %v1360
        %v1362 = vpop.f32.mrb[0].mxu0
        %v1363 = vadd.f32 %v1250, %v1362
        %v1364 = vpop.f32.mrb[0].mxu0
        %v1365 = vadd.f32 %v1252, %v1364
        %1366 = vmatprep.mubr.bf16.mxu0 %v620
        %1367 = vmatmul.mubr.bf16.gmra.mrb[0].mxu0 %v619
        %v1368 = vpop.f32.mrb[0].mxu0
        %v1369 = vadd.f32 %v1256, %v1368
        %v1370 = vpop.f32.mrb[0].mxu0
        %v1371 = vadd.f32 %v1258, %v1370
        %v1372 = vpop.f32.mrb[0].mxu0
        %v1373 = vadd.f32 %v1260, %v1372
        %v1374 = vpop.f32.mrb[0].mxu0
        %v1375 = vadd.f32 %v1262, %v1374
        %1376 = vdwg.mxu0
        %1377 = vmatprep.subr.bf16.mxu0 %v1024
        %1378 = vmatpush1.bf16.msra.mxu0 %v1023
        %1379 = vmatprep.subr.bf16.mxu0 %v1026
        %1380 = vmatpush1.bf16.msra.mxu0 %v1025
        %1381 = vmatprep.subr.bf16.mxu0 %v1028
        %1382 = vmatpush1.bf16.msra.mxu0 %v1027
        %1383 = vmatprep.subr.bf16.mxu0 %v1030
        %1384 = vmatpush1.bf16.msra.mxu0 %v1029
        %1385 = vmatprep.subr.bf16.mxu0 %v1032
        %1386 = vmatpush1.bf16.msra.mxu0 %v1031
        %1387 = vmatprep.subr.bf16.mxu0 %v1034
        %1388 = vmatpush1.bf16.msra.mxu0 %v1033
        %1389 = vmatprep.subr.bf16.mxu0 %v1036
        %1390 = vmatpush1.bf16.msra.mxu0 %v1035
        %1391 = vmatprep.subr.bf16.mxu0 %v1038
        %1392 = vmatpush1.bf16.msra.mxu0 %v1037
        %1393 = vmatprep.subr.bf16.mxu0 %v1040
        %1394 = vmatpush1.bf16.msra.mxu0 %v1039
        %1395 = vmatprep.subr.bf16.mxu0 %v1042
        %1396 = vmatpush1.bf16.msra.mxu0 %v1041
        %1397 = vmatprep.subr.bf16.mxu0 %v1044
        %1398 = vmatpush1.bf16.msra.mxu0 %v1043
        %1399 = vmatprep.subr.bf16.mxu0 %v1046
        %1400 = vmatpush1.bf16.msra.mxu0 %v1045
        %1401 = vmatprep.subr.bf16.mxu0 %v1048
        %1402 = vmatpush1.bf16.msra.mxu0 %v1047
        %1403 = vmatprep.subr.bf16.mxu0 %v1050
        %1404 = vmatpush1.bf16.msra.mxu0 %v1049
        %1405 = vmatprep.subr.bf16.mxu0 %v1052
        %1406 = vmatpush1.bf16.msra.mxu0 %v1051
        %1407 = vmatprep.subr.bf16.mxu0 %v1054
        %1408 = vmatpush1.bf16.msra.mxu0 %v1053
        %1409 = vmatprep.mubr.bf16.mxu0 %v580
        %1410 = vmatmul.mubr.bf16.gmra.mrb[0].mxu0 %v579
        %v1411 = vpop.f32.mrb[0].mxu0
        %v1412 = vadd.f32 %v1299, %v1411
        %v1413 = vpop.f32.mrb[0].mxu0
        %v1414 = vadd.f32 %v1301, %v1413
        %v1415 = vpop.f32.mrb[0].mxu0
        %v1416 = vadd.f32 %v1303, %v1415
        %v1417 = vpop.f32.mrb[0].mxu0
        %v1418 = vadd.f32 %v1305, %v1417
        %1419 = vmatprep.mubr.bf16.mxu0 %v586
        %1420 = vmatmul.mubr.bf16.gmra.mrb[0].mxu0 %v585
        %v1421 = vpop.f32.mrb[0].mxu0
        %v1422 = vadd.f32 %v1309, %v1421
        %v1423 = vpop.f32.mrb[0].mxu0
        %v1424 = vadd.f32 %v1311, %v1423
        %v1425 = vpop.f32.mrb[0].mxu0
        %v1426 = vadd.f32 %v1313, %v1425
        %v1427 = vpop.f32.mrb[0].mxu0
        %v1428 = vadd.f32 %v1315, %v1427
        %1429 = vmatprep.mubr.bf16.mxu0 %v592
        %1430 = vmatmul.mubr.bf16.gmra.mrb[0].mxu0 %v591
        %v1431 = vpop.f32.mrb[0].mxu0
        %v1432 = vadd.f32 %v1319, %v1431
        %v1433 = vpop.f32.mrb[0].mxu0
        %v1434 = vadd.f32 %v1321, %v1433
        %v1435 = vpop.f32.mrb[0].mxu0
        %v1436 = vadd.f32 %v1323, %v1435
        %v1437 = vpop.f32.mrb[0].mxu0
        %v1438 = vadd.f32 %v1325, %v1437
        %1439 = vmatprep.mubr.bf16.mxu0 %v598
        %1440 = vmatmul.mubr.bf16.gmra.mrb[0].mxu0 %v597
        %v1441 = vpop.f32.mrb[0].mxu0
        %v1442 = vadd.f32 %v1329, %v1441
        %v1443 = vpop.f32.mrb[0].mxu0
        %v1444 = vadd.f32 %v1331, %v1443
        %v1445 = vpop.f32.mrb[0].mxu0
        %v1446 = vadd.f32 %v1333, %v1445
        %v1447 = vpop.f32.mrb[0].mxu0
        %v1448 = vadd.f32 %v1335, %v1447
        %1449 = vmatprep.mubr.bf16.mxu0 %v604
        %1450 = vmatmul.mubr.bf16.gmra.mrb[0].mxu0 %v603
        %v1451 = vpop.f32.mrb[0].mxu0
        %v1452 = vadd.f32 %v1339, %v1451
        %v1453 = vpop.f32.mrb[0].mxu0
        %v1454 = vadd.f32 %v1341, %v1453
        %v1455 = vpop.f32.mrb[0].mxu0
        %v1456 = vadd.f32 %v1343, %v1455
        %v1457 = vpop.f32.mrb[0].mxu0
        %v1458 = vadd.f32 %v1345, %v1457
        %1459 = vmatprep.mubr.bf16.mxu0 %v610
        %1460 = vmatmul.mubr.bf16.gmra.mrb[0].mxu0 %v609
        %v1461 = vpop.f32.mrb[0].mxu0
        %v1462 = vadd.f32 %v1349, %v1461
        %v1463 = vpop.f32.mrb[0].mxu0
        %v1464 = vadd.f32 %v1351, %v1463
        %v1465 = vpop.f32.mrb[0].mxu0
        %v1466 = vadd.f32 %v1353, %v1465
        %v1467 = vpop.f32.mrb[0].mxu0
        %v1468 = vadd.f32 %v1355, %v1467
        %1469 = vmatprep.mubr.bf16.mxu0 %v616
        %1470 = vmatmul.mubr.bf16.gmra.mrb[0].mxu0 %v615
        %v1471 = vpop.f32.mrb[0].mxu0
        %v1472 = vadd.f32 %v1359, %v1471
        %v1473 = vpop.f32.mrb[0].mxu0
        %v1474 = vadd.f32 %v1361, %v1473
        %v1475 = vpop.f32.mrb[0].mxu0
        %v1476 = vadd.f32 %v1363, %v1475
        %v1477 = vpop.f32.mrb[0].mxu0
        %v1478 = vadd.f32 %v1365, %v1477
        %1479 = vmatprep.mubr.bf16.mxu0 %v622
        %1480 = vmatmul.mubr.bf16.gmra.mrb[0].mxu0 %v621
        %v1481 = vpop.f32.mrb[0].mxu0
        %v1482 = vadd.f32 %v1369, %v1481
        %v1483 = vpop.f32.mrb[0].mxu0
        %v1484 = vadd.f32 %v1371, %v1483
        %v1485 = vpop.f32.mrb[0].mxu0
        %v1486 = vadd.f32 %v1373, %v1485
        %v1487 = vpop.f32.mrb[0].mxu0
        %v1488 = vadd.f32 %v1375, %v1487
        %1489 = vdwg.mxu0
        %v1490 = vmax.f32 %v1412, 0.0
        %v1491 = vmax.f32 %v1414, 0.0
        %v1492 = vmax.f32 %v1416, 0.0
        %v1493 = vmax.f32 %v1418, 0.0
        %v1494 = vmax.f32 %v1422, 0.0
        %v1495 = vmax.f32 %v1424, 0.0
        %v1496 = vmax.f32 %v1426, 0.0
        %v1497 = vmax.f32 %v1428, 0.0
        %v1498 = vmax.f32 %v1432, 0.0
        %v1499 = vmax.f32 %v1434, 0.0
        %v1500 = vmax.f32 %v1436, 0.0
        %v1501 = vmax.f32 %v1438, 0.0
        %v1502 = vmax.f32 %v1442, 0.0
        %v1503 = vmax.f32 %v1444, 0.0
        %v1504 = vmax.f32 %v1446, 0.0
        %v1505 = vmax.f32 %v1448, 0.0
        %v1506 = vmax.f32 %v1452, 0.0
        %v1507 = vmax.f32 %v1454, 0.0
        %v1508 = vmax.f32 %v1456, 0.0
        %v1509 = vmax.f32 %v1458, 0.0
        %v1510 = vmax.f32 %v1462, 0.0
        %v1511 = vmax.f32 %v1464, 0.0
        %v1512 = vmax.f32 %v1466, 0.0
        %v1513 = vmax.f32 %v1468, 0.0
        %v1514 = vmax.f32 %v1472, 0.0
        %v1515 = vmax.f32 %v1474, 0.0
        %v1516 = vmax.f32 %v1476, 0.0
        %v1517 = vmax.f32 %v1478, 0.0
        %v1518 = vmax.f32 %v1482, 0.0
        %v1519 = vmax.f32 %v1484, 0.0
        %v1520 = vmax.f32 %v1486, 0.0
        %v1521 = vmax.f32 %v1488, 0.0
        %v1522 = vpack.c.bf16 %v1492, %v1490
        %v1523 = vpack.c.bf16 %v1493, %v1491
        %v1524 = vpack.c.bf16 %v1496, %v1494
        %v1525 = vpack.c.bf16 %v1497, %v1495
        %v1526 = vpack.c.bf16 %v1500, %v1498
        %v1527 = vpack.c.bf16 %v1501, %v1499
        %v1528 = vpack.c.bf16 %v1504, %v1502
        %v1529 = vpack.c.bf16 %v1505, %v1503
        %v1530 = vpack.c.bf16 %v1508, %v1506
        %v1531 = vpack.c.bf16 %v1509, %v1507
        %v1532 = vpack.c.bf16 %v1512, %v1510
        %v1533 = vpack.c.bf16 %v1513, %v1511
        %v1534 = vpack.c.bf16 %v1516, %v1514
        %v1535 = vpack.c.bf16 %v1517, %v1515
        %v1536 = vpack.c.bf16 %v1520, %v1518
        %v1537 = vpack.c.bf16 %v1521, %v1519
        %v1538 = vld [vmem:[#allocation7] sm:$0xff]
        %v1539 = vld [vmem:[#allocation7 + $0x8] sm:$0xff]
        %v1540 = vld [vmem:[#allocation7 + $0x10] sm:$0xff]
        %v1541 = vld [vmem:[#allocation7 + $0x18] sm:$0xff]
        %v1542 = vld [vmem:[#allocation7 + $0x20] sm:$0xff]
        %v1543 = vld [vmem:[#allocation7 + $0x28] sm:$0xff]
        %v1544 = vld [vmem:[#allocation7 + $0x30] sm:$0xff]
        %v1545 = vld [vmem:[#allocation7 + $0x38] sm:$0xff]
        %v1546 = vld [vmem:[#allocation7 + $0x40] sm:$0xff]
        %v1547 = vld [vmem:[#allocation7 + $0x48] sm:$0xff]
        %v1548 = vld [vmem:[#allocation7 + $0x50] sm:$0xff]
        %v1549 = vld [vmem:[#allocation7 + $0x58] sm:$0xff]
        %v1550 = vld [vmem:[#allocation7 + $0x60] sm:$0xff]
        %v1551 = vld [vmem:[#allocation7 + $0x68] sm:$0xff]
        %v1552 = vld [vmem:[#allocation7 + $0x70] sm:$0xff]
        %v1553 = vld [vmem:[#allocation7 + $0x78] sm:$0xff]
        %v1554 = vld [vmem:[#allocation7 + $0x80] sm:$0xff]
        %v1555 = vld [vmem:[#allocation7 + $0x88] sm:$0xff]
        %v1556 = vld [vmem:[#allocation7 + $0x90] sm:$0xff]
        %v1557 = vld [vmem:[#allocation7 + $0x98] sm:$0xff]
        %v1558 = vld [vmem:[#allocation7 + $0xa0] sm:$0xff]
        %v1559 = vld [vmem:[#allocation7 + $0xa8] sm:$0xff]
        %v1560 = vld [vmem:[#allocation7 + $0xb0] sm:$0xff]
        %v1561 = vld [vmem:[#allocation7 + $0xb8] sm:$0xff]
        %v1562 = vld [vmem:[#allocation7 + $0xc0] sm:$0xff]
        %v1563 = vld [vmem:[#allocation7 + $0xc8] sm:$0xff]
        %v1564 = vld [vmem:[#allocation7 + $0xd0] sm:$0xff]
        %v1565 = vld [vmem:[#allocation7 + $0xd8] sm:$0xff]
        %v1566 = vld [vmem:[#allocation7 + $0xe0] sm:$0xff]
        %v1567 = vld [vmem:[#allocation7 + $0xe8] sm:$0xff]
        %v1568 = vld [vmem:[#allocation7 + $0xf0] sm:$0xff]
        %v1569 = vld [vmem:[#allocation7 + $0xf8] sm:$0xff]
        %v1570 = vld [vmem:[%s4] sm:$0x3]
        %v1572 = vlaneseq
        %v1573 = vshrl.u32 %v1572, 7
        %v1574 = vsub.s32 0, %v1573
        %v1575 = vrot.slane %v1570, %v1574
        %v1576 = vlaneseq
        %v1577 = vshrl.u32 %v1576, 7
        %v1578 = vsub.s32 1, %v1577
        %v1579 = vrot.slane %v1570, %v1578
        %v1614 = vunpack.c.l.b16 %v1538
        %v1615 = vunpack.c.h.b16 %v1538
        %v1616 = vunpack.c.l.b16 %v1539
        %v1617 = vunpack.c.h.b16 %v1539
        %v1618 = vunpack.c.l.b16 %v1540
        %v1619 = vunpack.c.h.b16 %v1540
        %v1620 = vunpack.c.l.b16 %v1541
        %v1621 = vunpack.c.h.b16 %v1541
        %v1622 = vunpack.c.l.b16 %v1542
        %v1623 = vunpack.c.h.b16 %v1542
        %v1624 = vunpack.c.l.b16 %v1543
        %v1625 = vunpack.c.h.b16 %v1543
        %v1626 = vunpack.c.l.b16 %v1544
        %v1627 = vunpack.c.h.b16 %v1544
        %v1628 = vunpack.c.l.b16 %v1545
        %v1629 = vunpack.c.h.b16 %v1545
        %v1630 = vunpack.c.l.b16 %v1546
        %v1631 = vunpack.c.h.b16 %v1546
        %v1632 = vunpack.c.l.b16 %v1547
        %v1633 = vunpack.c.h.b16 %v1547
        %v1634 = vunpack.c.l.b16 %v1548
        %v1635 = vunpack.c.h.b16 %v1548
        %v1636 = vunpack.c.l.b16 %v1549
        %v1637 = vunpack.c.h.b16 %v1549
        %v1638 = vunpack.c.l.b16 %v1550
        %v1639 = vunpack.c.h.b16 %v1550
        %v1640 = vunpack.c.l.b16 %v1551
        %v1641 = vunpack.c.h.b16 %v1551
        %v1642 = vunpack.c.l.b16 %v1552
        %v1643 = vunpack.c.h.b16 %v1552
        %v1644 = vunpack.c.l.b16 %v1553
        %v1645 = vunpack.c.h.b16 %v1553
        %v1646 = vunpack.c.l.b16 %v1554
        %v1647 = vunpack.c.h.b16 %v1554
        %v1648 = vunpack.c.l.b16 %v1555
        %v1649 = vunpack.c.h.b16 %v1555
        %v1650 = vunpack.c.l.b16 %v1556
        %v1651 = vunpack.c.h.b16 %v1556
        %v1652 = vunpack.c.l.b16 %v1557
        %v1653 = vunpack.c.h.b16 %v1557
        %v1654 = vunpack.c.l.b16 %v1558
        %v1655 = vunpack.c.h.b16 %v1558
        %v1656 = vunpack.c.l.b16 %v1559
        %v1657 = vunpack.c.h.b16 %v1559
        %v1658 = vunpack.c.l.b16 %v1560
        %v1659 = vunpack.c.h.b16 %v1560
        %v1660 = vunpack.c.l.b16 %v1561
        %v1661 = vunpack.c.h.b16 %v1561
        %v1662 = vunpack.c.l.b16 %v1562
        %v1663 = vunpack.c.h.b16 %v1562
        %v1664 = vunpack.c.l.b16 %v1563
        %v1665 = vunpack.c.h.b16 %v1563
        %v1666 = vunpack.c.l.b16 %v1564
        %v1667 = vunpack.c.h.b16 %v1564
        %v1668 = vunpack.c.l.b16 %v1565
        %v1669 = vunpack.c.h.b16 %v1565
        %v1670 = vunpack.c.l.b16 %v1566
        %v1671 = vunpack.c.h.b16 %v1566
        %v1672 = vunpack.c.l.b16 %v1567
        %v1673 = vunpack.c.h.b16 %v1567
        %v1674 = vunpack.c.l.b16 %v1568
        %v1675 = vunpack.c.h.b16 %v1568
        %v1676 = vunpack.c.l.b16 %v1569
        %v1677 = vunpack.c.h.b16 %v1569
        %v1678 = vpack.c.b16 %v1616, %v1614
        %v1679 = vpack.c.b16 %v1617, %v1615
        %v1680 = vpack.c.b16 %v1620, %v1618
        %v1681 = vpack.c.b16 %v1621, %v1619
        %v1682 = vpack.c.b16 %v1624, %v1622
        %v1683 = vpack.c.b16 %v1625, %v1623
        %v1684 = vpack.c.b16 %v1628, %v1626
        %v1685 = vpack.c.b16 %v1629, %v1627
        %v1686 = vpack.c.b16 %v1632, %v1630
        %v1687 = vpack.c.b16 %v1633, %v1631
        %v1688 = vpack.c.b16 %v1636, %v1634
        %v1689 = vpack.c.b16 %v1637, %v1635
        %v1690 = vpack.c.b16 %v1640, %v1638
        %v1691 = vpack.c.b16 %v1641, %v1639
        %v1692 = vpack.c.b16 %v1644, %v1642
        %v1693 = vpack.c.b16 %v1645, %v1643
        %v1694 = vpack.c.b16 %v1648, %v1646
        %v1695 = vpack.c.b16 %v1649, %v1647
        %v1696 = vpack.c.b16 %v1652, %v1650
        %v1697 = vpack.c.b16 %v1653, %v1651
        %v1698 = vpack.c.b16 %v1656, %v1654
        %v1699 = vpack.c.b16 %v1657, %v1655
        %v1700 = vpack.c.b16 %v1660, %v1658
        %v1701 = vpack.c.b16 %v1661, %v1659
        %v1702 = vpack.c.b16 %v1664, %v1662
        %v1703 = vpack.c.b16 %v1665, %v1663
        %v1704 = vpack.c.b16 %v1668, %v1666
        %v1705 = vpack.c.b16 %v1669, %v1667
        %v1706 = vpack.c.b16 %v1672, %v1670
        %v1707 = vpack.c.b16 %v1673, %v1671
        %v1708 = vpack.c.b16 %v1676, %v1674
        %v1709 = vpack.c.b16 %v1677, %v1675
        %1742 = vmatprep.subr.bf16.mxu0 %v1679
        %1743 = vmatpush1.bf16.msra.mxu0 %v1678
        %1744 = vmatprep.subr.bf16.mxu0 %v1681
        %1745 = vmatpush1.bf16.msra.mxu0 %v1680
        %1746 = vmatprep.subr.bf16.mxu0 %v1683
        %1747 = vmatpush1.bf16.msra.mxu0 %v1682
        %1748 = vmatprep.subr.bf16.mxu0 %v1685
        %1749 = vmatpush1.bf16.msra.mxu0 %v1684
        %1750 = vmatprep.subr.bf16.mxu0 %v1687
        %1751 = vmatpush1.bf16.msra.mxu0 %v1686
        %1752 = vmatprep.subr.bf16.mxu0 %v1689
        %1753 = vmatpush1.bf16.msra.mxu0 %v1688
        %1754 = vmatprep.subr.bf16.mxu0 %v1691
        %1755 = vmatpush1.bf16.msra.mxu0 %v1690
        %1756 = vmatprep.subr.bf16.mxu0 %v1693
        %1757 = vmatpush1.bf16.msra.mxu0 %v1692
        %1758 = vmatprep.subr.bf16.mxu0 %v1695
        %1759 = vmatpush1.bf16.msra.mxu0 %v1694
        %1760 = vmatprep.subr.bf16.mxu0 %v1697
        %1761 = vmatpush1.bf16.msra.mxu0 %v1696
        %1762 = vmatprep.subr.bf16.mxu0 %v1699
        %1763 = vmatpush1.bf16.msra.mxu0 %v1698
        %1764 = vmatprep.subr.bf16.mxu0 %v1701
        %1765 = vmatpush1.bf16.msra.mxu0 %v1700
        %1766 = vmatprep.subr.bf16.mxu0 %v1703
        %1767 = vmatpush1.bf16.msra.mxu0 %v1702
        %1768 = vmatprep.subr.bf16.mxu0 %v1705
        %1769 = vmatpush1.bf16.msra.mxu0 %v1704
        %1770 = vmatprep.subr.bf16.mxu0 %v1707
        %1771 = vmatpush1.bf16.msra.mxu0 %v1706
        %1772 = vmatprep.subr.bf16.mxu0 %v1709
        %1773 = vmatpush1.bf16.msra.mxu0 %v1708
        %1774 = vmatprep.mubr.bf16.mxu0 %v1523
        %1775 = vmatmul.mubr.bf16.gmra.mrb[0].mxu0 %v1522
        %v1776 = vpop.f32.mrb[0].mxu0
        %v1777 = vadd.f32 %v1575, %v1776
        %v1778 = vpop.f32.mrb[0].mxu0
        %v1779 = vadd.f32 %v1579, %v1778
        %v1780 = vpop.f32.mrb[0].mxu0
        %v1781 = vadd.f32 %v1575, %v1780
        %v1782 = vpop.f32.mrb[0].mxu0
        %v1783 = vadd.f32 %v1579, %v1782
        %1784 = vmatprep.mubr.bf16.mxu0 %v1525
        %1785 = vmatmul.mubr.bf16.gmra.mrb[0].mxu0 %v1524
        %v1786 = vpop.f32.mrb[0].mxu0
        %v1787 = vadd.f32 %v1575, %v1786
        %v1788 = vpop.f32.mrb[0].mxu0
        %v1789 = vadd.f32 %v1579, %v1788
        %v1790 = vpop.f32.mrb[0].mxu0
        %v1791 = vadd.f32 %v1575, %v1790
        %v1792 = vpop.f32.mrb[0].mxu0
        %v1793 = vadd.f32 %v1579, %v1792
        %1794 = vmatprep.mubr.bf16.mxu0 %v1527
        %1795 = vmatmul.mubr.bf16.gmra.mrb[0].mxu0 %v1526
        %v1796 = vpop.f32.mrb[0].mxu0
        %v1797 = vadd.f32 %v1575, %v1796
        %v1798 = vpop.f32.mrb[0].mxu0
        %v1799 = vadd.f32 %v1579, %v1798
        %v1800 = vpop.f32.mrb[0].mxu0
        %v1801 = vadd.f32 %v1575, %v1800
        %v1802 = vpop.f32.mrb[0].mxu0
        %v1803 = vadd.f32 %v1579, %v1802
        %1804 = vmatprep.mubr.bf16.mxu0 %v1529
        %1805 = vmatmul.mubr.bf16.gmra.mrb[0].mxu0 %v1528
        %v1806 = vpop.f32.mrb[0].mxu0
        %v1807 = vadd.f32 %v1575, %v1806
        %v1808 = vpop.f32.mrb[0].mxu0
        %v1809 = vadd.f32 %v1579, %v1808
        %v1810 = vpop.f32.mrb[0].mxu0
        %v1811 = vadd.f32 %v1575, %v1810
        %v1812 = vpop.f32.mrb[0].mxu0
        %v1813 = vadd.f32 %v1579, %v1812
        %1814 = vmatprep.mubr.bf16.mxu0 %v1531
        %1815 = vmatmul.mubr.bf16.gmra.mrb[0].mxu0 %v1530
        %v1816 = vpop.f32.mrb[0].mxu0
        %v1817 = vadd.f32 %v1575, %v1816
        %v1818 = vpop.f32.mrb[0].mxu0
        %v1819 = vadd.f32 %v1579, %v1818
        %v1820 = vpop.f32.mrb[0].mxu0
        %v1821 = vadd.f32 %v1575, %v1820
        %v1822 = vpop.f32.mrb[0].mxu0
        %v1823 = vadd.f32 %v1579, %v1822
        %1824 = vmatprep.mubr.bf16.mxu0 %v1533
        %1825 = vmatmul.mubr.bf16.gmra.mrb[0].mxu0 %v1532
        %v1826 = vpop.f32.mrb[0].mxu0
        %v1827 = vadd.f32 %v1575, %v1826
        %v1828 = vpop.f32.mrb[0].mxu0
        %v1829 = vadd.f32 %v1579, %v1828
        %v1830 = vpop.f32.mrb[0].mxu0
        %v1831 = vadd.f32 %v1575, %v1830
        %v1832 = vpop.f32.mrb[0].mxu0
        %v1833 = vadd.f32 %v1579, %v1832
        %1834 = vmatprep.mubr.bf16.mxu0 %v1535
        %1835 = vmatmul.mubr.bf16.gmra.mrb[0].mxu0 %v1534
        %v1836 = vpop.f32.mrb[0].mxu0
        %v1837 = vadd.f32 %v1575, %v1836
        %v1838 = vpop.f32.mrb[0].mxu0
        %v1839 = vadd.f32 %v1579, %v1838
        %v1840 = vpop.f32.mrb[0].mxu0
        %v1841 = vadd.f32 %v1575, %v1840
        %v1842 = vpop.f32.mrb[0].mxu0
        %v1843 = vadd.f32 %v1579, %v1842
        %1844 = vmatprep.mubr.bf16.mxu0 %v1537
        %1845 = vmatmul.mubr.bf16.gmra.mrb[0].mxu0 %v1536
        %v1846 = vpop.f32.mrb[0].mxu0
        %v1847 = vadd.f32 %v1575, %v1846
        %v1848 = vpop.f32.mrb[0].mxu0
        %v1849 = vadd.f32 %v1579, %v1848
        %v1850 = vpop.f32.mrb[0].mxu0
        %v1851 = vadd.f32 %v1575, %v1850
        %v1852 = vpop.f32.mrb[0].mxu0
        %v1853 = vadd.f32 %v1579, %v1852
        %1854 = vdwg.mxu0
        %v1855 = vmul.f32 %v1777, %v1777
        %v1856 = vmul.f32 %v1779, %v1779
        %v1857 = vmul.f32 %v1781, %v1781
        %v1858 = vmul.f32 %v1783, %v1783
        %v1859 = vmul.f32 %v1787, %v1787
        %v1860 = vmul.f32 %v1789, %v1789
        %v1861 = vmul.f32 %v1791, %v1791
        %v1862 = vmul.f32 %v1793, %v1793
        %v1863 = vmul.f32 %v1797, %v1797
        %v1864 = vmul.f32 %v1799, %v1799
        %v1865 = vmul.f32 %v1801, %v1801
        %v1866 = vmul.f32 %v1803, %v1803
        %v1867 = vmul.f32 %v1807, %v1807
        %v1868 = vmul.f32 %v1809, %v1809
        %v1869 = vmul.f32 %v1811, %v1811
        %v1870 = vmul.f32 %v1813, %v1813
        %v1871 = vmul.f32 %v1817, %v1817
        %v1872 = vmul.f32 %v1819, %v1819
        %v1873 = vmul.f32 %v1821, %v1821
        %v1874 = vmul.f32 %v1823, %v1823
        %v1875 = vmul.f32 %v1827, %v1827
        %v1876 = vmul.f32 %v1829, %v1829
        %v1877 = vmul.f32 %v1831, %v1831
        %v1878 = vmul.f32 %v1833, %v1833
        %v1879 = vmul.f32 %v1837, %v1837
        %v1880 = vmul.f32 %v1839, %v1839
        %v1881 = vmul.f32 %v1841, %v1841
        %v1882 = vmul.f32 %v1843, %v1843
        %v1883 = vmul.f32 %v1847, %v1847
        %v1884 = vmul.f32 %v1849, %v1849
        %v1885 = vmul.f32 %v1851, %v1851
        %v1886 = vmul.f32 %v1853, %v1853
        %v1887 = vadd.f32 %v1855, %v1856
        %1888 = vadd.xlane.f32.xlu0 %v1887
        %v1889 = vpop.xlane.xlu0 %1888
        %v1890 = vadd.f32 %v1857, %v1858
        %1891 = vadd.xlane.f32.xlu0 %v1890
        %v1892 = vpop.xlane.xlu0 %1891
        %v1893 = vadd.f32 %v1859, %v1860
        %1894 = vadd.xlane.f32.xlu0 %v1893
        %v1895 = vpop.xlane.xlu0 %1894
        %v1896 = vadd.f32 %v1861, %v1862
        %1897 = vadd.xlane.f32.xlu0 %v1896
        %v1898 = vpop.xlane.xlu0 %1897
        %v1899 = vadd.f32 %v1863, %v1864
        %1900 = vadd.xlane.f32.xlu0 %v1899
        %v1901 = vpop.xlane.xlu0 %1900
        %v1902 = vadd.f32 %v1865, %v1866
        %1903 = vadd.xlane.f32.xlu0 %v1902
        %v1904 = vpop.xlane.xlu0 %1903
        %v1905 = vadd.f32 %v1867, %v1868
        %1906 = vadd.xlane.f32.xlu0 %v1905
        %v1907 = vpop.xlane.xlu0 %1906
        %v1908 = vadd.f32 %v1869, %v1870
        %1909 = vadd.xlane.f32.xlu0 %v1908
        %v1910 = vpop.xlane.xlu0 %1909
        %v1911 = vadd.f32 %v1871, %v1872
        %1912 = vadd.xlane.f32.xlu0 %v1911
        %v1913 = vpop.xlane.xlu0 %1912
        %v1914 = vadd.f32 %v1873, %v1874
        %1915 = vadd.xlane.f32.xlu0 %v1914
        %v1916 = vpop.xlane.xlu0 %1915
        %v1917 = vadd.f32 %v1875, %v1876
        %1918 = vadd.xlane.f32.xlu0 %v1917
        %v1919 = vpop.xlane.xlu0 %1918
        %v1920 = vadd.f32 %v1877, %v1878
        %1921 = vadd.xlane.f32.xlu0 %v1920
        %v1922 = vpop.xlane.xlu0 %1921
        %v1923 = vadd.f32 %v1879, %v1880
        %1924 = vadd.xlane.f32.xlu0 %v1923
        %v1925 = vpop.xlane.xlu0 %1924
        %v1926 = vadd.f32 %v1881, %v1882
        %1927 = vadd.xlane.f32.xlu0 %v1926
        %v1928 = vpop.xlane.xlu0 %1927
        %v1929 = vadd.f32 %v1883, %v1884
        %1930 = vadd.xlane.f32.xlu0 %v1929
        %v1931 = vpop.xlane.xlu0 %1930
        %v1932 = vadd.f32 %v1885, %v1886
        %1933 = vadd.xlane.f32.xlu0 %v1932
        %v1934 = vpop.xlane.xlu0 %1933
        %v1935 = vmax.f32 %v1889, 1e-24
        %v1936 = vmax.f32 %v1892, 1e-24
        %v1937 = vmax.f32 %v1895, 1e-24
        %v1938 = vmax.f32 %v1898, 1e-24
        %v1939 = vmax.f32 %v1901, 1e-24
        %v1940 = vmax.f32 %v1904, 1e-24
        %v1941 = vmax.f32 %v1907, 1e-24
        %v1942 = vmax.f32 %v1910, 1e-24
        %v1943 = vmax.f32 %v1913, 1e-24
        %v1944 = vmax.f32 %v1916, 1e-24
        %v1945 = vmax.f32 %v1919, 1e-24
        %v1946 = vmax.f32 %v1922, 1e-24
        %v1947 = vmax.f32 %v1925, 1e-24
        %v1948 = vmax.f32 %v1928, 1e-24
        %v1949 = vmax.f32 %v1931, 1e-24
        %v1950 = vmax.f32 %v1934, 1e-24
        %v1951 = vrsqrt.pop %v1935
        %v1952 = vrsqrt.pop %v1936
        %v1953 = vrsqrt.pop %v1937
        %v1954 = vrsqrt.pop %v1938
        %v1955 = vrsqrt.pop %v1939
        %v1956 = vrsqrt.pop %v1940
        %v1957 = vrsqrt.pop %v1941
        %v1958 = vrsqrt.pop %v1942
        %v1959 = vrsqrt.pop %v1943
        %v1960 = vrsqrt.pop %v1944
        %v1961 = vrsqrt.pop %v1945
        %v1962 = vrsqrt.pop %v1946
        %v1963 = vrsqrt.pop %v1947
        %v1964 = vrsqrt.pop %v1948
        %v1965 = vrsqrt.pop %v1949
        %v1966 = vrsqrt.pop %v1950
        %v1967 = vmul.f32 %v1777, %v1951
        %v1968 = vmul.f32 %v1779, %v1951
        %v1969 = vmul.f32 %v1781, %v1952
        %v1970 = vmul.f32 %v1783, %v1952
        %v1971 = vmul.f32 %v1787, %v1953
        %v1972 = vmul.f32 %v1789, %v1953
        %v1973 = vmul.f32 %v1791, %v1954
        %v1974 = vmul.f32 %v1793, %v1954
        %v1975 = vmul.f32 %v1797, %v1955
        %v1976 = vmul.f32 %v1799, %v1955
        %v1977 = vmul.f32 %v1801, %v1956
        %v1978 = vmul.f32 %v1803, %v1956
        %v1979 = vmul.f32 %v1807, %v1957
        %v1980 = vmul.f32 %v1809, %v1957
        %v1981 = vmul.f32 %v1811, %v1958
        %v1982 = vmul.f32 %v1813, %v1958
        %v1983 = vmul.f32 %v1817, %v1959
        %v1984 = vmul.f32 %v1819, %v1959
        %v1985 = vmul.f32 %v1821, %v1960
        %v1986 = vmul.f32 %v1823, %v1960
        %v1987 = vmul.f32 %v1827, %v1961
        %v1988 = vmul.f32 %v1829, %v1961
        %v1989 = vmul.f32 %v1831, %v1962
        %v1990 = vmul.f32 %v1833, %v1962
        %v1991 = vmul.f32 %v1837, %v1963
        %v1992 = vmul.f32 %v1839, %v1963
        %v1993 = vmul.f32 %v1841, %v1964
        %v1994 = vmul.f32 %v1843, %v1964
        %v1995 = vmul.f32 %v1847, %v1965
        %v1996 = vmul.f32 %v1849, %v1965
        %v1997 = vmul.f32 %v1851, %v1966
        %v1998 = vmul.f32 %v1853, %v1966
        %v1999 = vpack.c.bf16 %v1969, %v1967
        %v2000 = vpack.c.bf16 %v1970, %v1968
        %v2001 = vpack.c.bf16 %v1973, %v1971
        %v2002 = vpack.c.bf16 %v1974, %v1972
        %v2003 = vpack.c.bf16 %v1977, %v1975
        %v2004 = vpack.c.bf16 %v1978, %v1976
        %v2005 = vpack.c.bf16 %v1981, %v1979
        %v2006 = vpack.c.bf16 %v1982, %v1980
        %v2007 = vpack.c.bf16 %v1985, %v1983
        %v2008 = vpack.c.bf16 %v1986, %v1984
        %v2009 = vpack.c.bf16 %v1989, %v1987
        %v2010 = vpack.c.bf16 %v1990, %v1988
        %v2011 = vpack.c.bf16 %v1993, %v1991
        %v2012 = vpack.c.bf16 %v1994, %v1992
        %v2013 = vpack.c.bf16 %v1997, %v1995
        %v2014 = vpack.c.bf16 %v1998, %v1996
        %v2031 = vunpack.c.l.b16 %v1999
        %v2032 = vunpack.c.l.b16 %v2000
        %v2033 = vunpack.c.h.b16 %v1999
        %v2034 = vunpack.c.h.b16 %v2000
        %v2035 = vunpack.c.l.b16 %v2001
        %v2036 = vunpack.c.l.b16 %v2002
        %v2037 = vunpack.c.h.b16 %v2001
        %v2038 = vunpack.c.h.b16 %v2002
        %v2039 = vunpack.c.l.b16 %v2003
        %v2040 = vunpack.c.l.b16 %v2004
        %v2041 = vunpack.c.h.b16 %v2003
        %v2042 = vunpack.c.h.b16 %v2004
        %v2043 = vunpack.c.l.b16 %v2005
        %v2044 = vunpack.c.l.b16 %v2006
        %v2045 = vunpack.c.h.b16 %v2005
        %v2046 = vunpack.c.h.b16 %v2006
        %v2047 = vunpack.c.l.b16 %v2007
        %v2048 = vunpack.c.l.b16 %v2008
        %v2049 = vunpack.c.h.b16 %v2007
        %v2050 = vunpack.c.h.b16 %v2008
        %v2051 = vunpack.c.l.b16 %v2009
        %v2052 = vunpack.c.l.b16 %v2010
        %v2053 = vunpack.c.h.b16 %v2009
        %v2054 = vunpack.c.h.b16 %v2010
        %v2055 = vunpack.c.l.b16 %v2011
        %v2056 = vunpack.c.l.b16 %v2012
        %v2057 = vunpack.c.h.b16 %v2011
        %v2058 = vunpack.c.h.b16 %v2012
        %v2059 = vunpack.c.l.b16 %v2013
        %v2060 = vunpack.c.l.b16 %v2014
        %v2061 = vunpack.c.h.b16 %v2013
        %v2062 = vunpack.c.h.b16 %v2014
        %v2063 = vpack.c.b16 %v2032, %v2031
        %v2064 = vpack.c.b16 %v2034, %v2033
        %v2065 = vpack.c.b16 %v2036, %v2035
        %v2066 = vpack.c.b16 %v2038, %v2037
        %v2067 = vpack.c.b16 %v2040, %v2039
        %v2068 = vpack.c.b16 %v2042, %v2041
        %v2069 = vpack.c.b16 %v2044, %v2043
        %v2070 = vpack.c.b16 %v2046, %v2045
        %v2071 = vpack.c.b16 %v2048, %v2047
        %v2072 = vpack.c.b16 %v2050, %v2049
        %v2073 = vpack.c.b16 %v2052, %v2051
        %v2074 = vpack.c.b16 %v2054, %v2053
        %v2075 = vpack.c.b16 %v2056, %v2055
        %v2076 = vpack.c.b16 %v2058, %v2057
        %v2077 = vpack.c.b16 %v2060, %v2059
        %v2078 = vpack.c.b16 %v2062, %v2061
        %2095 = vst [vmem:[%s272] sm:$0xff] %v2063
        %2096 = vst [vmem:[%s272 + $0x8] sm:$0xff] %v2064
        %2097 = vst [vmem:[%s272 + $0x10] sm:$0xff] %v2065
        %2098 = vst [vmem:[%s272 + $0x18] sm:$0xff] %v2066
        %2099 = vst [vmem:[%s272 + $0x20] sm:$0xff] %v2067
        %2100 = vst [vmem:[%s272 + $0x28] sm:$0xff] %v2068
        %2101 = vst [vmem:[%s272 + $0x30] sm:$0xff] %v2069
        %2102 = vst [vmem:[%s272 + $0x38] sm:$0xff] %v2070
        %2103 = vst [vmem:[%s272 + $0x40] sm:$0xff] %v2071
        %2104 = vst [vmem:[%s272 + $0x48] sm:$0xff] %v2072
        %2105 = vst [vmem:[%s272 + $0x50] sm:$0xff] %v2073
        %2106 = vst [vmem:[%s272 + $0x58] sm:$0xff] %v2074
        %2107 = vst [vmem:[%s272 + $0x60] sm:$0xff] %v2075
        %2108 = vst [vmem:[%s272 + $0x68] sm:$0xff] %v2076
        %2109 = vst [vmem:[%s272 + $0x70] sm:$0xff] %v2077
        %2110 = vst [vmem:[%s272 + $0x78] sm:$0xff] %v2078
        %s2111 = sand.u32 %s141, 1
        %s2112 = scalar_lea.sflag [#allocation4], %s2111
        %s2113 = sand.u32 %s141, 1
        %s2114 = smul.addr %s2113, 128
        %s2115 = scalar_lea.vmem [#allocation8], %s2114
        // Predicated region
        $region53: #{tpu_custom_call.1} parent=39 // pred_check
          %p2116 = pneg %p151
        $region54: #{tpu_custom_call.1} parent=39 // pred_check_branch
          %2118 = sbr.rel (%p2116) target = $region56
        $region55: #{tpu_custom_call.1} parent=39 // pred_region
          %s2119 = smul.u32 16, %s23
          %s2121 = ssub.s32 2048, 2048
          %2122 = vsyncadd %s2112, %s2121
          %s2123 = smul.addr %s2119, 2
          %s2124 = smul.addr %s2123, 64
          %s2125 = scalar_lea.hbm %s5, %s2124
          %s2126 = sshll.u32 %s2115, 4
          %s2127 = int_to_ptr.vmem [resolvable:$true] %s2126
          %2132 = dma.vmem_to_hbm [thread:$0]  %s2127, 2048, %s2125, %s2112, 128, 128, 8
        $region56: #{tpu_custom_call.1} parent=39 // pred_fallthru
          _
      $region40: #{tpu_custom_call.1} parent=5 // pred_fallthru
        _
      %p2133 = scmp.le.s32.totalorder 2, %s18
      // Predicated region
      $region57: #{tpu_custom_call.1} parent=5 // pred_check
        %p2134 = pneg %p2133
      $region58: #{tpu_custom_call.1} parent=5 // pred_check_branch
        %2136 = sbr.rel (%p2134) target = $region60
      $region59: #{tpu_custom_call.1} parent=5 // pred_region
        %s2137 = ssub.s32 %s18, 2
        // Predicated region
        $region61: #{tpu_custom_call.1} parent=59 // pred_check
          %p2138 = pneg %p157
        $region62: #{tpu_custom_call.1} parent=59 // pred_check_branch
          %2140 = sbr.rel (%p2138) target = $region64
        $region63: #{tpu_custom_call.1} parent=59 // pred_region
          %s2141 = sand.u32 %s142, 1
          %s2142 = scalar_lea.sflag [#allocation4], %s2141
          %s2143 = sand.u32 %s142, 1
          %s2144 = smul.addr %s2143, 128
          %s2145 = scalar_lea.vmem [#allocation8], %s2144
          %2146 = dma.done %s2142, 2048
        $region64: #{tpu_custom_call.1} parent=59 // pred_fallthru
          _
      $region60: #{tpu_custom_call.1} parent=5 // pred_fallthru
        _
    $region6: #{tpu_custom_call.1} parent=1 // loop_footer
      %s22 = sadd.s32 1, %s18
    $region7: #{tpu_custom_call.1} parent=1 // loop_footer_branch
      %17 = sbr.rel target = $region3
    $region8: #{tpu_custom_call.1} parent=1 // loop_exit
      _
    %2147 = vsyncpa [#allocation3], 1
    %s2148 = scalar_lea.sflag [#allocation3], 1
    %2149 = vsyncpa %s2148, 1
    %2150 = vsyncpa [#allocation6], 1
    %2151 = vsyncpa [#allocation4], 1
    %s2152 = scalar_lea.sflag [#allocation4], 1
    %2153 = vsyncpa %s2152, 1

</llo_original>
